<compile_context>
chip_gen: v5e
topology: v5e:2x2
jax: 0.10.0
libtpu: 0.0.40
codegen_flags: <defaults>
</compile_context>

<pallas_src>
import numpy as np
import jax
import jax.numpy as jnp
from jax.experimental import pallas as pl
from jax.experimental.pallas import tpu as pltpu

LANE = 128
_VMEM_LIMIT_BYTES = 48 * 1024 * 1024   # > v5e/v6e default scoped limit, < v7x 64 MiB


def _round_up(x, m):
    return (x + m - 1) // m * m


def _cdiv(a, b):
    return -(-a // b)


def _default_tm_max():
    # v6e/v5e have 128 MiB physical VMEM -> bigger row tiles amortize the
    # ~0.35us/grid-step pipeline overhead; v7x has 64 MiB/TC -> stay at 256.
    try:
        kind = jax.devices()[0].device_kind.lower()
    except Exception:
        return 256
    if "v6" in kind:
        return 512
    return 256


def _choose_tm(l_out, batch, tm_max):
    tm = min(tm_max, _round_up(max(l_out, 1), 8))
    # Keep at least 2 grid steps so both v7x TensorCores get work (megacore).
    if batch * _cdiv(max(l_out, 1), tm) < 2 and l_out > 8:
        tm = _round_up(_cdiv(l_out, 2), 8)
    return max(tm, 8)


# --------------------------------------------------------------------------
# Pallas kernel factory: one Dual-FE-Conv layer
#   frozen conv+GELU, finetuned conv+GELU, 1x1 fusion conv,
#   intermediate layers store (frozen, finetuned+fused), last layer stores fused.
# --------------------------------------------------------------------------
def _make_layer_kernel(*, k, s, tm, c_in, n_pad, is_first, is_last,
                       act_dtype, gelu_approximate):

    def _gelu(x):
        return jax.nn.gelu(x, approximate=gelu_approximate)

    def _conv(win_ref, w_ref):
        if c_in == 1:
            # Layer 0: window is a dense (TM, k) im2col of the 1-ch waveform.
            return jnp.dot(win_ref[...], w_ref[...],
                           preferred_element_type=jnp.float32)
        # Conv as k shifted matmuls over phase-grouped windows (s, G, C):
        # tap t = q*s + r of output row j reads win[r, j + q, :].
        acc = jnp.zeros((tm, n_pad), jnp.float32)
        for t in range(k):
            q, r = divmod(t, s)
            x_t = win_ref[r, q:q + tm, :]                 # (TM, C) static slice
            acc = acc + jnp.dot(x_t, w_ref[t],
                                preferred_element_type=jnp.float32)
        return acc

    def _compute(win_fr_ref, win_ft_ref, wfr_ref, wft_ref, wfa_ref, wfb_ref,
                 bf_ref, out_refs):
        h_fr = _gelu(_conv(win_fr_ref, wfr_ref))
        if is_last:
            h_fr_c = h_fr.astype(act_dtype)
        else:
            out_refs[0][...] = h_fr.astype(act_dtype)
            h_fr_c = out_refs[0][...]          # reuse stored tile as MXU LHS
        h_ft = _gelu(_conv(win_ft_ref, wft_ref))
        fused = (jnp.dot(h_fr_c, wfa_ref[...], preferred_element_type=jnp.float32)
                 + jnp.dot(h_ft.astype(act_dtype), wfb_ref[...],
                           preferred_element_type=jnp.float32)
                 + bf_ref[...])
        if is_last:
            out_refs[0][...] = fused.astype(out_refs[0].dtype)
        else:
            # fold the "h_finetuned += h_fused" of the NEXT layer in here
            out_refs[1][...] = (h_ft + fused).astype(act_dtype)

    if is_first:
        # layer 0: frozen == finetuned == input -> single de-duplicated stream
        def kernel(win_ref, wfr_ref, wft_ref, wfa_ref, wfb_ref, bf_ref,
                   *out_refs):
            _compute(win_ref, win_ref, wfr_ref, wft_ref, wfa_ref, wfb_ref,
                     bf_ref, out_refs)
    else:
        def kernel(win_fr_ref, win_ft_ref, wfr_ref, wft_ref, wfa_ref, wfb_ref,
                   bf_ref, *out_refs):
            _compute(win_fr_ref, win_ft_ref, wfr_ref, wft_ref, wfa_ref,
                     wfb_ref, bf_ref, out_refs)
    return kernel


def dual_layer_pallas(win_fr, win_ft, w_fr, w_ft, w_fa, w_fb, b_f, *,
                      k, s, tm, c_in, is_first, is_last, act_dtype,
                      gelu_approximate):
    n_blocks = win_fr.shape[0]
    n_pad = w_fr.shape[-1]

    kernel = _make_layer_kernel(k=k, s=s, tm=tm, c_in=c_in, n_pad=n_pad,
                                is_first=is_first, is_last=is_last,
                                act_dtype=act_dtype,
                                gelu_approximate=gelu_approximate)

    win_nd = win_fr.ndim
    win_spec = pl.BlockSpec((None,) + tuple(win_fr.shape[1:]),
                            lambda i: (i,) + (0,) * (win_nd - 1))
    out_spec = pl.BlockSpec((None, tm, n_pad), lambda i: (i, 0, 0))

    if is_last:
        out_specs = out_spec
        out_shape = jax.ShapeDtypeStruct((n_blocks, tm, n_pad), jnp.float32)
    else:
        out_specs = (out_spec, out_spec)
        out_shape = tuple(jax.ShapeDtypeStruct((n_blocks, tm, n_pad), act_dtype)
                          for _ in range(2))

    inputs = ([win_fr] if is_first else [win_fr, win_ft]) + \
             [w_fr, w_ft, w_fa, w_fb, b_f]

    def run(weight_mode):
        def pinned(arr):
            nd = arr.ndim
            if weight_mode is None:
                return pl.BlockSpec(arr.shape, lambda i: (0,) * nd)
            return pl.BlockSpec(arr.shape, lambda i: (0,) * nd,
                                pipeline_mode=weight_mode)

        in_specs = ([win_spec] * (1 if is_first else 2)
                    + [pinned(a) for a in (w_fr, w_ft, w_fa, w_fb, b_f)])
        return pl.pallas_call(
            kernel,
            grid=(n_blocks,),
            in_specs=in_specs,
            out_specs=out_specs,
            out_shape=out_shape,
            compiler_params=pltpu.CompilerParams(
                dimension_semantics=("parallel",),      # megacore row sharding
                vmem_limit_bytes=_VMEM_LIMIT_BYTES),
        )(*inputs)

    try:
        # Grid-invariant weights: single buffer (saves VMEM, esp. on v7x).
        return run(pl.Buffered(1))
    except Exception:
        return run(None)


# --------------------------------------------------------------------------
# One-time parameter preprocessing (hoisted out of the per-call forward)
# --------------------------------------------------------------------------
def preprocess_params(params, conv_kernel, *, dtype=jnp.bfloat16):
    prepped = []
    c_in_real, c_in_pad = 1, 1
    for p, k in zip(params, conv_kernel):
        c_out = p["w_frozen"].shape[0]
        n_pad = _round_up(c_out, LANE)

        def conv_w(w):
            # torch Conv1d weight (C_out, C_in, k) -> per-tap (k, C_in_pad, N_pad)
            wt = jnp.transpose(w, (2, 1, 0))             # (k, C_in, C_out)
            wt = jnp.pad(wt, ((0, 0), (0, c_in_pad - c_in_real),
                              (0, n_pad - c_out)))
            if c_in_pad == 1:                            # layer 0: (k, N_pad)
                wt = wt.reshape(k, n_pad)
            return wt.astype(dtype)

        w_fuse = p["w_fuse"][:, :, 0]                    # (C_out, 2*C_out)
        pad2 = ((0, n_pad - c_out), (0, n_pad - c_out))
        prepped.append(dict(
            w_fr=conv_w(p["w_frozen"]),
            w_ft=conv_w(p["w_finetuned"]),
            w_fa=jnp.pad(w_fuse[:, :c_out].T, pad2).astype(dtype),   # frozen half
            w_fb=jnp.pad(w_fuse[:, c_out:].T, pad2).astype(dtype),   # finetuned half
            b_f=jnp.pad(p["b_fuse"], (0, n_pad - c_out))
                 .reshape(1, n_pad).astype(jnp.float32),
            c_out=c_out, n_pad=n_pad))
        c_in_real, c_in_pad = c_out, n_pad
    return prepped


# --------------------------------------------------------------------------
# Window builders (the only off-kernel data movement; ~1x activation volume)
# --------------------------------------------------------------------------
def _build_phase_windows(x, l_true, k, s, tm):
    """x: (B, L_phys, C) token-major.  Returns (B*nt, s, G, C) with
    win[b*nt+i, r, g, :] = x[b, i*tm*s + g*s + r, :]; tap t = q*s + r of
    output row j reads win[r, j+q, :] (contiguous slice inside the kernel)."""
    B, l_phys, C = x.shape
    l_out = (l_true - k) // s + 1
    nt = _cdiv(l_out, tm)
    G = tm + _cdiv(k, s) - 1
    l_need = (nt - 1) * tm * s + G * s
    if l_need > l_phys:
        x = jnp.pad(x, ((0, 0), (0, l_need - l_phys), (0, 0)))
    idx = (jnp.arange(nt)[:, None, None] * (tm * s)
           + jnp.arange(s)[None, :, None]
           + jnp.arange(G)[None, None, :] * s)            # (nt, s, G)
    win = x[:, idx, :]                                    # (B, nt, s, G, C)
    return win.reshape(B * nt, s, G, C), nt


def _build_tap_windows_1ch(x, l_true, k, s, tm):
    """Per-tile im2col for the 1-channel waveform (layer 0 only); the k/s
    expansion is negligible at C == 1 and yields a dense (TM, k) MXU LHS."""
    B, l_phys, _ = x.shape
    l_out = (l_true - k) // s + 1
    nt = _cdiv(l_out, tm)
    l_need = (nt * tm - 1) * s + k
    if l_need > l_phys:
        x = jnp.pad(x, ((0, 0), (0, l_need - l_phys), (0, 0)))
    idx = jnp.arange(nt * tm)[:, None] * s + jnp.arange(k)[None, :]  # (nt*tm, k)
    win = x[:, idx, :]                                               # (B, nt*tm, k, 1)
    return win.reshape(B * nt, tm, k), nt


# --------------------------------------------------------------------------
# Forward pass (mirrors DualFEConv.forward)
# --------------------------------------------------------------------------
def dual_fe_conv_forward(input_values, prepped, conv_kernel, conv_stride, *,
                         act_dtype=jnp.bfloat16, gelu_approximate=True,
                         tm_max=None):
    if tm_max is None:
        tm_max = _default_tm_max()
    B, T = input_values.shape
    n_layers = len(conv_kernel)

    h_fr = input_values[:, :, None].astype(act_dtype)   # (B, T, 1) token-major
    h_ftf = h_fr                                         # finetuned(+fused) stream
    l_true = T

    for li, (k, s) in enumerate(zip(conv_kernel, conv_stride)):
        p = prepped[li]
        is_first = li == 0
        is_last = li == n_layers - 1
        c_in = h_fr.shape[-1]
        l_out = (l_true - k) // s + 1
        tm = _choose_tm(l_out, B, tm_max)

        builder = _build_tap_windows_1ch if c_in == 1 else _build_phase_windows
        win_fr, nt = builder(h_fr, l_true, k, s, tm)
        win_ft = None if is_first else builder(h_ftf, l_true, k, s, tm)[0]

        outs = dual_layer_pallas(
            win_fr, win_ft, p["w_fr"], p["w_ft"], p["w_fa"], p["w_fb"],
            p["b_f"], k=k, s=s, tm=tm, c_in=c_in, is_first=is_first,
            is_last=is_last, act_dtype=act_dtype,
            gelu_approximate=gelu_approximate)

        if is_last:
            fused = outs.reshape(B, nt * tm, p["n_pad"])[:, :l_out, :p["c_out"]]
            # return in PyTorch Conv1d NCL layout, like the original module
            return jnp.transpose(fused, (0, 2, 1)).astype(jnp.float32)

        o_fr, o_ftf = outs
        # keep channel-padded, token-major activations; rows >= l_out are
        # garbage but can only ever feed rows that get sliced off later.
        h_fr = o_fr.reshape(B, nt * tm, p["n_pad"])
        h_ftf = o_ftf.reshape(B, nt * tm, p["n_pad"])
        l_true = l_out


# --------------------------------------------------------------------------
# Pure-JAX reference (lax.conv, exact erf GELU, f32) mirroring PyTorch forward
# --------------------------------------------------------------------------
def _conv1d_ref(x, w, stride, bias=None):
    y = jax.lax.conv_general_dilated(
        x, w, (stride,), "VALID", dimension_numbers=("NCH", "OIH", "NCH"))
    if bias is not None:
        y = y + bias[None, :, None]
    return y


def dual_fe_conv_reference(input_values, params, conv_kernel, conv_stride):
    h_frozen = h_finetuned = input_values[:, None, :]
    h_fused = None
    for li, (k, s) in enumerate(zip(conv_kernel, conv_stride)):
        p = params[li]
        h_frozen = jax.nn.gelu(_conv1d_ref(h_frozen, p["w_frozen"], s),
                               approximate=False)
        if h_fused is not None:
            h_finetuned = h_finetuned + h_fused
        h_finetuned = jax.nn.gelu(_conv1d_ref(h_finetuned, p["w_finetuned"], s),
                                  approximate=False)
        h_fused = _conv1d_ref(jnp.concatenate([h_frozen, h_finetuned], axis=1),
                              p["w_fuse"], 1, bias=p["b_fuse"])
    return h_fused


# --------------------------------------------------------------------------
# Deterministic parameter init (synthetic, no checkpoint)
# --------------------------------------------------------------------------
def make_params(key, conv_dim, conv_kernel):
    params = []
    c_in = 1
    scale = 0.05
    for c_out, k in zip(conv_dim, conv_kernel):
        key, k1, k2, k3, k4 = jax.random.split(key, 5)
        params.append({
            "w_frozen":    scale * jax.random.normal(k1, (c_out, c_in, k), jnp.float32),
            "w_finetuned": scale * jax.random.normal(k2, (c_out, c_in, k), jnp.float32),
            "w_fuse":      scale * jax.random.normal(k3, (c_out, 2 * c_out, 1), jnp.float32),
            "b_fuse":      scale * jax.random.normal(k4, (c_out,), jnp.float32),
        })
        c_in = c_out
    return params


if __name__ == "__main__":
    conv_dim = (8, 16, 16)
    conv_kernel = (4, 3, 3)
    conv_stride = (2, 2, 2)
    B, T = 2, 64

    key = jax.random.PRNGKey(0)
    key, k_x = jax.random.split(key)
    input_values = jax.random.normal(k_x, (B, T), jnp.float32)
    params = make_params(key, conv_dim, conv_kernel)

    ref = jax.block_until_ready(
        dual_fe_conv_reference(input_values, params, conv_kernel, conv_stride))

    # Fast path: bf16 activations/weights (f32 accumulation) + tanh GELU (EUP).
    prepped_bf16 = preprocess_params(params, conv_kernel, dtype=jnp.bfloat16)
    out_fast = dual_fe_conv_forward(input_values, prepped_bf16, conv_kernel,
                                    conv_stride, act_dtype=jnp.bfloat16,
                                    gelu_approximate=True)
    out_fast = jax.block_until_ready(out_fast)
    np.testing.assert_allclose(np.asarray(out_fast), np.asarray(ref),
                               rtol=2e-2, atol=2e-2)

    # Exact path: f32 + erf GELU reproduces the reference to 1e-3.
    prepped_f32 = preprocess_params(params, conv_kernel, dtype=jnp.float32)
    out_exact = dual_fe_conv_forward(input_values, prepped_f32, conv_kernel,
                                     conv_stride, act_dtype=jnp.float32,
                                     gelu_approximate=False)
    out_exact = jax.block_until_ready(out_exact)
    np.testing.assert_allclose(np.asarray(out_exact), np.asarray(ref),
                               rtol=1e-3, atol=1e-3)

    print("KERNEL_OK")
</pallas_src>

<mosaic_0001>
module attributes {stable_mosaic.version = 11 : i64} {
  func.func @kernel(%arg0: i32, %arg1: memref<1x32x4xbf16, #tpu.memory_space<vmem>>, %arg2: memref<4x128xbf16, #tpu.memory_space<vmem>>, %arg3: memref<4x128xbf16, #tpu.memory_space<vmem>>, %arg4: memref<128x128xbf16, #tpu.memory_space<vmem>>, %arg5: memref<128x128xbf16, #tpu.memory_space<vmem>>, %arg6: memref<1x128xf32, #tpu.memory_space<vmem>>, %arg7: memref<1x32x128xbf16, #tpu.memory_space<vmem>>, %arg8: memref<1x32x128xbf16, #tpu.memory_space<vmem>>) attributes {dimension_semantics = [#tpu.dimension_semantics<parallel>], iteration_bounds = array<i64: 2>, scalar_prefetch = 0 : i64, scratch_operands = 0 : i64, tpu.core_type = #tpu.core_type<tc>, window_params = [{transform_indices = @transform_0, window_bounds = array<i64: 1, 32, 4>}, {pipeline_mode = #tpu.pipeline_mode<synchronous>, transform_indices = @transform_1, window_bounds = array<i64: 4, 128>}, {pipeline_mode = #tpu.pipeline_mode<synchronous>, transform_indices = @transform_2, window_bounds = array<i64: 4, 128>}, {pipeline_mode = #tpu.pipeline_mode<synchronous>, transform_indices = @transform_3, window_bounds = array<i64: 128, 128>}, {pipeline_mode = #tpu.pipeline_mode<synchronous>, transform_indices = @transform_4, window_bounds = array<i64: 128, 128>}, {pipeline_mode = #tpu.pipeline_mode<synchronous>, transform_indices = @transform_5, window_bounds = array<i64: 1, 128>}, {transform_indices = @transform_6, window_bounds = array<i64: 1, 32, 128>}, {transform_indices = @transform_7, window_bounds = array<i64: 1, 32, 128>}]} {
    %c0 = arith.constant 0 : index
    %c0_0 = arith.constant 0 : index
    %c0_1 = arith.constant 0 : index
    %0 = vector.load %arg1[%c0, %c0_0, %c0_1] : memref<1x32x4xbf16, #tpu.memory_space<vmem>>, vector<1x32x4xbf16>
    %1 = vector.shape_cast %0 : vector<1x32x4xbf16> to vector<32x4xbf16>
    %c0_2 = arith.constant 0 : index
    %c0_3 = arith.constant 0 : index
    %2 = vector.load %arg2[%c0_2, %c0_3] : memref<4x128xbf16, #tpu.memory_space<vmem>>, vector<4x128xbf16>
    %cst = arith.constant dense<0.000000e+00> : vector<32x128xf32>
    %3 = tpu.matmul %1, %2, %cst {dimension_numbers = #tpu.dot_dimension_numbers<[1], [0], [0], [1], [0, 0, 1, 1], [], []>} : vector<32x4xbf16>, vector<4x128xbf16>, vector<32x128xf32> -> vector<32x128xf32>
    %4 = arith.mulf %3, %3 : vector<32x128xf32>
    %5 = arith.mulf %3, %4 : vector<32x128xf32>
    %cst_4 = arith.constant 4.471500e-02 : f32
    %6 = vector.broadcast %cst_4 : f32 to vector<32x128xf32>
    %7 = arith.mulf %6, %5 : vector<32x128xf32>
    %8 = arith.addf %3, %7 : vector<32x128xf32>
    %cst_5 = arith.constant 0.797884583 : f32
    %9 = vector.broadcast %cst_5 : f32 to vector<32x128xf32>
    %10 = arith.mulf %9, %8 : vector<32x128xf32>
    %11 = math.tanh %10 : vector<32x128xf32>
    %cst_6 = arith.constant 1.000000e+00 : f32
    %12 = vector.broadcast %cst_6 : f32 to vector<32x128xf32>
    %13 = arith.addf %12, %11 : vector<32x128xf32>
    %cst_7 = arith.constant 5.000000e-01 : f32
    %14 = vector.broadcast %cst_7 : f32 to vector<32x128xf32>
    %15 = arith.mulf %14, %13 : vector<32x128xf32>
    %16 = arith.mulf %3, %15 : vector<32x128xf32>
    %17 = arith.truncf %16 : vector<32x128xf32> to vector<32x128xbf16>
    %c0_8 = arith.constant 0 : index
    %c0_9 = arith.constant 0 : index
    %c0_10 = arith.constant 0 : index
    %18 = vector.load %arg7[%c0_8, %c0_9, %c0_10] : memref<1x32x128xbf16, #tpu.memory_space<vmem>>, vector<1x32x128xbf16>
    %19 = vector.shape_cast %18 : vector<1x32x128xbf16> to vector<32x128xbf16>
    %20 = vector.shape_cast %17 : vector<32x128xbf16> to vector<1x32x128xbf16>
    tpu.vector_store %arg7[%c0_8, %c0_9, %c0_10], %20 {strides = array<i32>} : memref<1x32x128xbf16, #tpu.memory_space<vmem>>, vector<1x32x128xbf16>,
    %c0_11 = arith.constant 0 : index
    %c0_12 = arith.constant 0 : index
    %c0_13 = arith.constant 0 : index
    %21 = vector.load %arg7[%c0_11, %c0_12, %c0_13] : memref<1x32x128xbf16, #tpu.memory_space<vmem>>, vector<1x32x128xbf16>
    %22 = vector.shape_cast %21 : vector<1x32x128xbf16> to vector<32x128xbf16>
    %c0_14 = arith.constant 0 : index
    %c0_15 = arith.constant 0 : index
    %c0_16 = arith.constant 0 : index
    %23 = vector.load %arg1[%c0_14, %c0_15, %c0_16] : memref<1x32x4xbf16, #tpu.memory_space<vmem>>, vector<1x32x4xbf16>
    %24 = vector.shape_cast %23 : vector<1x32x4xbf16> to vector<32x4xbf16>
    %c0_17 = arith.constant 0 : index
    %c0_18 = arith.constant 0 : index
    %25 = vector.load %arg3[%c0_17, %c0_18] : memref<4x128xbf16, #tpu.memory_space<vmem>>, vector<4x128xbf16>
    %cst_19 = arith.constant dense<0.000000e+00> : vector<32x128xf32>
    %26 = tpu.matmul %24, %25, %cst_19 {dimension_numbers = #tpu.dot_dimension_numbers<[1], [0], [0], [1], [0, 0, 1, 1], [], []>} : vector<32x4xbf16>, vector<4x128xbf16>, vector<32x128xf32> -> vector<32x128xf32>
    %27 = arith.mulf %26, %26 : vector<32x128xf32>
    %28 = arith.mulf %26, %27 : vector<32x128xf32>
    %cst_20 = arith.constant 4.471500e-02 : f32
    %29 = vector.broadcast %cst_20 : f32 to vector<32x128xf32>
    %30 = arith.mulf %29, %28 : vector<32x128xf32>
    %31 = arith.addf %26, %30 : vector<32x128xf32>
    %cst_21 = arith.constant 0.797884583 : f32
    %32 = vector.broadcast %cst_21 : f32 to vector<32x128xf32>
    %33 = arith.mulf %32, %31 : vector<32x128xf32>
    %34 = math.tanh %33 : vector<32x128xf32>
    %cst_22 = arith.constant 1.000000e+00 : f32
    %35 = vector.broadcast %cst_22 : f32 to vector<32x128xf32>
    %36 = arith.addf %35, %34 : vector<32x128xf32>
    %cst_23 = arith.constant 5.000000e-01 : f32
    %37 = vector.broadcast %cst_23 : f32 to vector<32x128xf32>
    %38 = arith.mulf %37, %36 : vector<32x128xf32>
    %39 = arith.mulf %26, %38 : vector<32x128xf32>
    %c0_24 = arith.constant 0 : index
    %c0_25 = arith.constant 0 : index
    %40 = vector.load %arg4[%c0_24, %c0_25] : memref<128x128xbf16, #tpu.memory_space<vmem>>, vector<128x128xbf16>
    %cst_26 = arith.constant dense<0.000000e+00> : vector<32x128xf32>
    %41 = tpu.matmul %22, %40, %cst_26 {dimension_numbers = #tpu.dot_dimension_numbers<[1], [0], [0], [1], [0, 0, 1, 1], [], []>} : vector<32x128xbf16>, vector<128x128xbf16>, vector<32x128xf32> -> vector<32x128xf32>
    %42 = arith.truncf %39 : vector<32x128xf32> to vector<32x128xbf16>
    %c0_27 = arith.constant 0 : index
    %c0_28 = arith.constant 0 : index
    %43 = vector.load %arg5[%c0_27, %c0_28] : memref<128x128xbf16, #tpu.memory_space<vmem>>, vector<128x128xbf16>
    %cst_29 = arith.constant dense<0.000000e+00> : vector<32x128xf32>
    %44 = tpu.matmul %42, %43, %cst_29 {dimension_numbers = #tpu.dot_dimension_numbers<[1], [0], [0], [1], [0, 0, 1, 1], [], []>} : vector<32x128xbf16>, vector<128x128xbf16>, vector<32x128xf32> -> vector<32x128xf32>
    %45 = arith.addf %41, %44 : vector<32x128xf32>
    %c0_30 = arith.constant 0 : index
    %c0_31 = arith.constant 0 : index
    %46 = vector.load %arg6[%c0_30, %c0_31] : memref<1x128xf32, #tpu.memory_space<vmem>>, vector<1x128xf32>
    %47 = vector.broadcast %46 : vector<1x128xf32> to vector<32x128xf32>
    %48 = arith.addf %45, %47 : vector<32x128xf32>
    %49 = arith.addf %39, %48 : vector<32x128xf32>
    %50 = arith.truncf %49 : vector<32x128xf32> to vector<32x128xbf16>
    %c0_32 = arith.constant 0 : index
    %c0_33 = arith.constant 0 : index
    %c0_34 = arith.constant 0 : index
    %51 = vector.load %arg8[%c0_32, %c0_33, %c0_34] : memref<1x32x128xbf16, #tpu.memory_space<vmem>>, vector<1x32x128xbf16>
    %52 = vector.shape_cast %51 : vector<1x32x128xbf16> to vector<32x128xbf16>
    %53 = vector.shape_cast %50 : vector<32x128xbf16> to vector<1x32x128xbf16>
    tpu.vector_store %arg8[%c0_32, %c0_33, %c0_34], %53 {strides = array<i32>} : memref<1x32x128xbf16, #tpu.memory_space<vmem>>, vector<1x32x128xbf16>,
    return
  }
  func.func @transform_0(%arg0: i32) -> (i32, i32, i32) {
    %c0_i32 = arith.constant 0 : i32
    %c0_i32_0 = arith.constant 0 : i32
    %c0_i32_1 = arith.constant 0 : i32
    return %arg0, %c0_i32, %c0_i32_0 : i32, i32, i32
  }
  func.func @transform_1(%arg0: i32) -> (i32, i32) {
    %c0_i32 = arith.constant 0 : i32
    %c0_i32_0 = arith.constant 0 : i32
    %c0_i32_1 = arith.constant 0 : i32
    return %c0_i32, %c0_i32_0 : i32, i32
  }
  func.func @transform_2(%arg0: i32) -> (i32, i32) {
    %c0_i32 = arith.constant 0 : i32
    %c0_i32_0 = arith.constant 0 : i32
    %c0_i32_1 = arith.constant 0 : i32
    return %c0_i32, %c0_i32_0 : i32, i32
  }
  func.func @transform_3(%arg0: i32) -> (i32, i32) {
    %c0_i32 = arith.constant 0 : i32
    %c0_i32_0 = arith.constant 0 : i32
    %c0_i32_1 = arith.constant 0 : i32
    return %c0_i32, %c0_i32_0 : i32, i32
  }
  func.func @transform_4(%arg0: i32) -> (i32, i32) {
    %c0_i32 = arith.constant 0 : i32
    %c0_i32_0 = arith.constant 0 : i32
    %c0_i32_1 = arith.constant 0 : i32
    return %c0_i32, %c0_i32_0 : i32, i32
  }
  func.func @transform_5(%arg0: i32) -> (i32, i32) {
    %c0_i32 = arith.constant 0 : i32
    %c0_i32_0 = arith.constant 0 : i32
    %c0_i32_1 = arith.constant 0 : i32
    return %c0_i32, %c0_i32_0 : i32, i32
  }
  func.func @transform_6(%arg0: i32) -> (i32, i32, i32) {
    %c0_i32 = arith.constant 0 : i32
    %c0_i32_0 = arith.constant 0 : i32
    %c0_i32_1 = arith.constant 0 : i32
    return %arg0, %c0_i32, %c0_i32_0 : i32, i32, i32
  }
  func.func @transform_7(%arg0: i32) -> (i32, i32, i32) {
    %c0_i32 = arith.constant 0 : i32
    %c0_i32_0 = arith.constant 0 : i32
    %c0_i32_1 = arith.constant 0 : i32
    return %arg0, %c0_i32, %c0_i32_0 : i32, i32, i32
  }
}

module attributes {stable_mosaic.version = 11 : i64} {
  func.func @kernel(%arg0: i32, %arg1: memref<1x32x4xbf16, #tpu.memory_space<vmem>>, %arg2: memref<4x128xbf16, #tpu.memory_space<vmem>>, %arg3: memref<4x128xbf16, #tpu.memory_space<vmem>>, %arg4: memref<128x128xbf16, #tpu.memory_space<vmem>>, %arg5: memref<128x128xbf16, #tpu.memory_space<vmem>>, %arg6: memref<1x128xf32, #tpu.memory_space<vmem>>, %arg7: memref<1x32x128xbf16, #tpu.memory_space<vmem>>, %arg8: memref<1x32x128xbf16, #tpu.memory_space<vmem>>) attributes {dimension_semantics = [#tpu.dimension_semantics<parallel>], iteration_bounds = array<i64: 2>, scalar_prefetch = 0 : i64, scratch_operands = 0 : i64, tpu.core_type = #tpu.core_type<tc>, window_params = [{transform_indices = @transform_0, window_bounds = array<i64: 1, 32, 4>}, {pipeline_mode = #tpu.pipeline_mode<synchronous>, transform_indices = @transform_1, window_bounds = array<i64: 4, 128>}, {pipeline_mode = #tpu.pipeline_mode<synchronous>, transform_indices = @transform_2, window_bounds = array<i64: 4, 128>}, {pipeline_mode = #tpu.pipeline_mode<synchronous>, transform_indices = @transform_3, window_bounds = array<i64: 128, 128>}, {pipeline_mode = #tpu.pipeline_mode<synchronous>, transform_indices = @transform_4, window_bounds = array<i64: 128, 128>}, {pipeline_mode = #tpu.pipeline_mode<synchronous>, transform_indices = @transform_5, window_bounds = array<i64: 1, 128>}, {transform_indices = @transform_6, window_bounds = array<i64: 1, 32, 128>}, {transform_indices = @transform_7, window_bounds = array<i64: 1, 32, 128>}]} {
    %c0 = arith.constant 0 : index
    %c0_0 = arith.constant 0 : index
    %c0_1 = arith.constant 0 : index
    %0 = vector.load %arg1[%c0, %c0_0, %c0_1] : memref<1x32x4xbf16, #tpu.memory_space<vmem>>, vector<1x32x4xbf16>
    %1 = vector.shape_cast %0 : vector<1x32x4xbf16> to vector<32x4xbf16>
    %c0_2 = arith.constant 0 : index
    %c0_3 = arith.constant 0 : index
    %2 = vector.load %arg2[%c0_2, %c0_3] : memref<4x128xbf16, #tpu.memory_space<vmem>>, vector<4x128xbf16>
    %cst = arith.constant dense<0.000000e+00> : vector<32x128xf32>
    %3 = tpu.matmul %1, %2, %cst {dimension_numbers = #tpu.dot_dimension_numbers<[1], [0], [0], [1], [0, 0, 1, 1], [], []>} : vector<32x4xbf16>, vector<4x128xbf16>, vector<32x128xf32> -> vector<32x128xf32>
    %4 = arith.mulf %3, %3 : vector<32x128xf32>
    %5 = arith.mulf %3, %4 : vector<32x128xf32>
    %cst_4 = arith.constant 4.471500e-02 : f32
    %6 = vector.broadcast %cst_4 : f32 to vector<32x128xf32>
    %7 = arith.mulf %6, %5 : vector<32x128xf32>
    %8 = arith.addf %3, %7 : vector<32x128xf32>
    %cst_5 = arith.constant 0.797884583 : f32
    %9 = vector.broadcast %cst_5 : f32 to vector<32x128xf32>
    %10 = arith.mulf %9, %8 : vector<32x128xf32>
    %11 = math.tanh %10 : vector<32x128xf32>
    %cst_6 = arith.constant 1.000000e+00 : f32
    %12 = vector.broadcast %cst_6 : f32 to vector<32x128xf32>
    %13 = arith.addf %12, %11 : vector<32x128xf32>
    %cst_7 = arith.constant 5.000000e-01 : f32
    %14 = vector.broadcast %cst_7 : f32 to vector<32x128xf32>
    %15 = arith.mulf %14, %13 : vector<32x128xf32>
    %16 = arith.mulf %3, %15 : vector<32x128xf32>
    %17 = arith.truncf %16 : vector<32x128xf32> to vector<32x128xbf16>
    %c0_8 = arith.constant 0 : index
    %c0_9 = arith.constant 0 : index
    %c0_10 = arith.constant 0 : index
    %18 = vector.load %arg7[%c0_8, %c0_9, %c0_10] : memref<1x32x128xbf16, #tpu.memory_space<vmem>>, vector<1x32x128xbf16>
    %19 = vector.shape_cast %18 : vector<1x32x128xbf16> to vector<32x128xbf16>
    %20 = vector.shape_cast %17 : vector<32x128xbf16> to vector<1x32x128xbf16>
    tpu.vector_store %arg7[%c0_8, %c0_9, %c0_10], %20 {strides = array<i32>} : memref<1x32x128xbf16, #tpu.memory_space<vmem>>, vector<1x32x128xbf16>,
    %c0_11 = arith.constant 0 : index
    %c0_12 = arith.constant 0 : index
    %c0_13 = arith.constant 0 : index
    %21 = vector.load %arg7[%c0_11, %c0_12, %c0_13] : memref<1x32x128xbf16, #tpu.memory_space<vmem>>, vector<1x32x128xbf16>
    %22 = vector.shape_cast %21 : vector<1x32x128xbf16> to vector<32x128xbf16>
    %c0_14 = arith.constant 0 : index
    %c0_15 = arith.constant 0 : index
    %c0_16 = arith.constant 0 : index
    %23 = vector.load %arg1[%c0_14, %c0_15, %c0_16] : memref<1x32x4xbf16, #tpu.memory_space<vmem>>, vector<1x32x4xbf16>
    %24 = vector.shape_cast %23 : vector<1x32x4xbf16> to vector<32x4xbf16>
    %c0_17 = arith.constant 0 : index
    %c0_18 = arith.constant 0 : index
    %25 = vector.load %arg3[%c0_17, %c0_18] : memref<4x128xbf16, #tpu.memory_space<vmem>>, vector<4x128xbf16>
    %cst_19 = arith.constant dense<0.000000e+00> : vector<32x128xf32>
    %26 = tpu.matmul %24, %25, %cst_19 {dimension_numbers = #tpu.dot_dimension_numbers<[1], [0], [0], [1], [0, 0, 1, 1], [], []>} : vector<32x4xbf16>, vector<4x128xbf16>, vector<32x128xf32> -> vector<32x128xf32>
    %27 = arith.mulf %26, %26 : vector<32x128xf32>
    %28 = arith.mulf %26, %27 : vector<32x128xf32>
    %cst_20 = arith.constant 4.471500e-02 : f32
    %29 = vector.broadcast %cst_20 : f32 to vector<32x128xf32>
    %30 = arith.mulf %29, %28 : vector<32x128xf32>
    %31 = arith.addf %26, %30 : vector<32x128xf32>
    %cst_21 = arith.constant 0.797884583 : f32
    %32 = vector.broadcast %cst_21 : f32 to vector<32x128xf32>
    %33 = arith.mulf %32, %31 : vector<32x128xf32>
    %34 = math.tanh %33 : vector<32x128xf32>
    %cst_22 = arith.constant 1.000000e+00 : f32
    %35 = vector.broadcast %cst_22 : f32 to vector<32x128xf32>
    %36 = arith.addf %35, %34 : vector<32x128xf32>
    %cst_23 = arith.constant 5.000000e-01 : f32
    %37 = vector.broadcast %cst_23 : f32 to vector<32x128xf32>
    %38 = arith.mulf %37, %36 : vector<32x128xf32>
    %39 = arith.mulf %26, %38 : vector<32x128xf32>
    %c0_24 = arith.constant 0 : index
    %c0_25 = arith.constant 0 : index
    %40 = vector.load %arg4[%c0_24, %c0_25] : memref<128x128xbf16, #tpu.memory_space<vmem>>, vector<128x128xbf16>
    %cst_26 = arith.constant dense<0.000000e+00> : vector<32x128xf32>
    %41 = tpu.matmul %22, %40, %cst_26 {dimension_numbers = #tpu.dot_dimension_numbers<[1], [0], [0], [1], [0, 0, 1, 1], [], []>} : vector<32x128xbf16>, vector<128x128xbf16>, vector<32x128xf32> -> vector<32x128xf32>
    %42 = arith.truncf %39 : vector<32x128xf32> to vector<32x128xbf16>
    %c0_27 = arith.constant 0 : index
    %c0_28 = arith.constant 0 : index
    %43 = vector.load %arg5[%c0_27, %c0_28] : memref<128x128xbf16, #tpu.memory_space<vmem>>, vector<128x128xbf16>
    %cst_29 = arith.constant dense<0.000000e+00> : vector<32x128xf32>
    %44 = tpu.matmul %42, %43, %cst_29 {dimension_numbers = #tpu.dot_dimension_numbers<[1], [0], [0], [1], [0, 0, 1, 1], [], []>} : vector<32x128xbf16>, vector<128x128xbf16>, vector<32x128xf32> -> vector<32x128xf32>
    %45 = arith.addf %41, %44 : vector<32x128xf32>
    %c0_30 = arith.constant 0 : index
    %c0_31 = arith.constant 0 : index
    %46 = vector.load %arg6[%c0_30, %c0_31] : memref<1x128xf32, #tpu.memory_space<vmem>>, vector<1x128xf32>
    %47 = vector.broadcast %46 : vector<1x128xf32> to vector<32x128xf32>
    %48 = arith.addf %45, %47 : vector<32x128xf32>
    %49 = arith.addf %39, %48 : vector<32x128xf32>
    %50 = arith.truncf %49 : vector<32x128xf32> to vector<32x128xbf16>
    %c0_32 = arith.constant 0 : index
    %c0_33 = arith.constant 0 : index
    %c0_34 = arith.constant 0 : index
    %51 = vector.load %arg8[%c0_32, %c0_33, %c0_34] : memref<1x32x128xbf16, #tpu.memory_space<vmem>>, vector<1x32x128xbf16>
    %52 = vector.shape_cast %51 : vector<1x32x128xbf16> to vector<32x128xbf16>
    %53 = vector.shape_cast %50 : vector<32x128xbf16> to vector<1x32x128xbf16>
    tpu.vector_store %arg8[%c0_32, %c0_33, %c0_34], %53 {strides = array<i32>} : memref<1x32x128xbf16, #tpu.memory_space<vmem>>, vector<1x32x128xbf16>,
    return
  }
  func.func @transform_0(%arg0: i32) -> (i32, i32, i32) {
    %c0_i32 = arith.constant 0 : i32
    %c0_i32_0 = arith.constant 0 : i32
    %c0_i32_1 = arith.constant 0 : i32
    return %arg0, %c0_i32, %c0_i32_0 : i32, i32, i32
  }
  func.func @transform_1(%arg0: i32) -> (i32, i32) {
    %c0_i32 = arith.constant 0 : i32
    %c0_i32_0 = arith.constant 0 : i32
    %c0_i32_1 = arith.constant 0 : i32
    return %c0_i32, %c0_i32_0 : i32, i32
  }
  func.func @transform_2(%arg0: i32) -> (i32, i32) {
    %c0_i32 = arith.constant 0 : i32
    %c0_i32_0 = arith.constant 0 : i32
    %c0_i32_1 = arith.constant 0 : i32
    return %c0_i32, %c0_i32_0 : i32, i32
  }
  func.func @transform_3(%arg0: i32) -> (i32, i32) {
    %c0_i32 = arith.constant 0 : i32
    %c0_i32_0 = arith.constant 0 : i32
    %c0_i32_1 = arith.constant 0 : i32
    return %c0_i32, %c0_i32_0 : i32, i32
  }
  func.func @transform_4(%arg0: i32) -> (i32, i32) {
    %c0_i32 = arith.constant 0 : i32
    %c0_i32_0 = arith.constant 0 : i32
    %c0_i32_1 = arith.constant 0 : i32
    return %c0_i32, %c0_i32_0 : i32, i32
  }
  func.func @transform_5(%arg0: i32) -> (i32, i32) {
    %c0_i32 = arith.constant 0 : i32
    %c0_i32_0 = arith.constant 0 : i32
    %c0_i32_1 = arith.constant 0 : i32
    return %c0_i32, %c0_i32_0 : i32, i32
  }
  func.func @transform_6(%arg0: i32) -> (i32, i32, i32) {
    %c0_i32 = arith.constant 0 : i32
    %c0_i32_0 = arith.constant 0 : i32
    %c0_i32_1 = arith.constant 0 : i32
    return %arg0, %c0_i32, %c0_i32_0 : i32, i32, i32
  }
  func.func @transform_7(%arg0: i32) -> (i32, i32, i32) {
    %c0_i32 = arith.constant 0 : i32
    %c0_i32_0 = arith.constant 0 : i32
    %c0_i32_1 = arith.constant 0 : i32
    return %arg0, %c0_i32, %c0_i32_0 : i32, i32, i32
  }
}

</mosaic_0001>

<llo_original>
// kernel: tpu_custom_call.1
$region0: #{tpu_custom_call.1}
  #allocation0 [shape = 'u32[]', space=smem, size = 0x4, offset = 0x4, fixed_abs, tag = 'smem constant byte address 0x4 - core index']
  #allocation1 [shape = 'u32[72,128]{1,0:T(1,128)}', space=vmem, size = 0x9000, scoped, tag = 'internal scratch']
  %s0 = inlined_call_operand.vmem [shape: bf16[2,32,4], index: 0, kind: input, shape index: {}]
  %s1 = inlined_call_operand.vmem [shape: bf16[4,128], index: 1, kind: input, shape index: {}]
  %s2 = inlined_call_operand.vmem [shape: bf16[4,128], index: 2, kind: input, shape index: {}]
  %s3 = inlined_call_operand.hbm [shape: bf16[128,128], index: 3, kind: input, shape index: {}]
  %s4 = inlined_call_operand.hbm [shape: bf16[128,128], index: 4, kind: input, shape index: {}]
  %s5 = inlined_call_operand.vmem [shape: f32[1,128], index: 5, kind: input, shape index: {}]
  %s6 = inlined_call_operand.hbm [shape: bf16[2,32,128], index: 6, kind: output, shape index: {0}]
  %s7 = inlined_call_operand.hbm [shape: bf16[2,32,128], index: 7, kind: output, shape index: {1}]
  %8 = xla_tuple %s6, %s7
  %s9 = sld [smem:[#allocation0]]
  $region73: #{tpu_custom_call.1} parent=0
    _
  %s11 = ssub.s32 1, %s9
  %s12 = scalar_select 0, %s11, %s9
  $region1: #{tpu_custom_call.1} parent=0
    #allocation2 [shape = 'u8[32768]{0}', space=vmem, size = 0x8000, scoped, tag = 'input window, operand 3, single buffered']
    #allocation3 [shape = 's32[2]{0}', space=sflag, size = 0x8, scoped, tag = 'scoped memory for tpu_custom_call.1']
    #allocation4 [shape = 's32[2]{0}', space=sflag, size = 0x8, scoped, tag = 'scoped memory for tpu_custom_call.1']
    #allocation5 [shape = 'u8[32768]{0}', space=vmem, size = 0x8000, scoped, tag = 'input window, operand 4, single buffered']
    #allocation6 [shape = 's32[1]{0}', space=sflag, size = 0x4, scoped, tag = 'scoped memory for tpu_custom_call.1']
    #allocation7 [shape = 'u8[16384]{0}', space=vmem, size = 0x4000, scoped, tag = 'output window, operand 0']
    #allocation8 [shape = 'u8[16384]{0}', space=vmem, size = 0x4000, scoped, tag = 'output window, operand 1']
    #allocation9 [shape = 's32[2]{0}', space=sflag, size = 0x8, scoped, tag = 'scoped memory for tpu_custom_call.1']
    %13 = vsyncpa [#allocation3], 0
    %14 = vsyncpa [#allocation6], 0
    %15 = vsyncpa [#allocation4], 0
    %s16 = scalar_lea.sflag [#allocation4], 1
    %17 = vsyncpa %s16, 0
    %18 = vsyncpa [#allocation9], 0
    %s19 = scalar_lea.sflag [#allocation9], 1
    %20 = vsyncpa %s19, 0
    loop: start=0, step=1, limit=4
    $region2: #{tpu_custom_call.1} parent=1 // loop_pre_header
      _
    $region3: #{tpu_custom_call.1} parent=1 // loop_header
      %s22 = sphi 0, %s26
      %p23 = scmp.ge.s32.totalorder %s22, 4
      %s32 = sphi 0, %s34
      %s35 = sphi 0, %s32
      %s36 = sphi 0, %s35
      %s52 = sphi 0, %s36
      %s56 = sphi 0, %s56
      %s58 = sphi 0, %s56
      %s59 = sphi 0, %s58
      %s73 = sphi 0, %s59
      %s77 = sphi 0, %s77
      %s79 = sphi 0, %s77
      %s80 = sphi 0, %s79
      %s94 = sphi 0, %s80
      %s98 = sphi 0, %s98
      %s100 = sphi 0, %s98
      %s101 = sphi 0, %s100
      %s115 = sphi 0, %s101
      %s119 = sphi 0, %s119
      %s121 = sphi 0, %s119
      %s122 = sphi 0, %s121
      %s136 = sphi 0, %s122
      %s140 = sphi 0, %s140
      %s142 = sphi 0, %s140
      %s143 = sphi 0, %s142
      %s157 = sphi 0, %s143
      %s163 = sphi 0, %s165
      %s166 = sphi 0, %s163
      %s167 = sphi 0, %s166
      %s183 = sphi 0, %s167
      %s189 = sphi 0, %s191
      %s192 = sphi 0, %s189
      %s193 = sphi 0, %s192
      %s209 = sphi 0, %s193
    $region4: #{tpu_custom_call.1} parent=1 // loop_header_branch
      %25 = sbr.rel (%p23) target = $region8
    $region5: #{tpu_custom_call.1} parent=1 // loop_body
      %s27 = ssub.s32 %s22, 1
      %s28 = ssub.s32 %s22, 2
      %s29 = sadd.s32 %s22, 1
      %s30 = ssub.s32 %s22, %s29
      %p31 = scmp.eq.s32.totalorder %s30, 0
      %s33 = sadd.s32 %s32, 1
      %s34 = scalar_select %p31, %s32, %s33
      %p37 = pneg %p31
      %p38 = scmp.eq.s32.totalorder %s22, 1
      %p39 = por %p37, %p38
      %p40 = scmp.ne.s32.totalorder %s32, %s35
      %p41 = scmp.eq.s32.totalorder %s22, 0
      %p42 = por %p40, %p41
      %p43 = scmp.ne.s32.totalorder %s32, %s35
      %p44 = scmp.eq.s32.totalorder %s27, 1
      %p45 = por %p43, %p44
      %p46 = scmp.ne.s32.totalorder %s35, %s36
      %p47 = scmp.eq.s32.totalorder %s27, 0
      %p48 = por %p46, %p47
      %p49 = scmp.ne.s32.totalorder %s35, %s36
      %p50 = scmp.eq.s32.totalorder %s28, 1
      %p51 = por %p49, %p50
      %p53 = scmp.ne.s32.totalorder %s36, %s52
      %p54 = scmp.eq.s32.totalorder %s28, 0
      %p55 = por %p53, %p54
      %s57 = sadd.s32 %s56, 1
      %p60 = scmp.eq.s32.totalorder %s22, 1
      %p61 = scmp.ne.s32.totalorder %s56, %s58
      %p62 = scmp.eq.s32.totalorder %s22, 0
      %p63 = por %p61, %p62
      %p64 = scmp.ne.s32.totalorder %s56, %s58
      %p65 = scmp.eq.s32.totalorder %s27, 1
      %p66 = por %p64, %p65
      %p67 = scmp.ne.s32.totalorder %s58, %s59
      %p68 = scmp.eq.s32.totalorder %s27, 0
      %p69 = por %p67, %p68
      %p70 = scmp.ne.s32.totalorder %s58, %s59
      %p71 = scmp.eq.s32.totalorder %s28, 1
      %p72 = por %p70, %p71
      %p74 = scmp.ne.s32.totalorder %s59, %s73
      %p75 = scmp.eq.s32.totalorder %s28, 0
      %p76 = por %p74, %p75
      %s78 = sadd.s32 %s77, 1
      %p81 = scmp.eq.s32.totalorder %s22, 1
      %p82 = scmp.ne.s32.totalorder %s77, %s79
      %p83 = scmp.eq.s32.totalorder %s22, 0
      %p84 = por %p82, %p83
      %p85 = scmp.ne.s32.totalorder %s77, %s79
      %p86 = scmp.eq.s32.totalorder %s27, 1
      %p87 = por %p85, %p86
      %p88 = scmp.ne.s32.totalorder %s79, %s80
      %p89 = scmp.eq.s32.totalorder %s27, 0
      %p90 = por %p88, %p89
      %p91 = scmp.ne.s32.totalorder %s79, %s80
      %p92 = scmp.eq.s32.totalorder %s28, 1
      %p93 = por %p91, %p92
      %p95 = scmp.ne.s32.totalorder %s80, %s94
      %p96 = scmp.eq.s32.totalorder %s28, 0
      %p97 = por %p95, %p96
      %s99 = sadd.s32 %s98, 1
      %p102 = scmp.eq.s32.totalorder %s22, 1
      %p103 = scmp.ne.s32.totalorder %s98, %s100
      %p104 = scmp.eq.s32.totalorder %s22, 0
      %p105 = por %p103, %p104
      %p106 = scmp.ne.s32.totalorder %s98, %s100
      %p107 = scmp.eq.s32.totalorder %s27, 1
      %p108 = por %p106, %p107
      %p109 = scmp.ne.s32.totalorder %s100, %s101
      %p110 = scmp.eq.s32.totalorder %s27, 0
      %p111 = por %p109, %p110
      %p112 = scmp.ne.s32.totalorder %s100, %s101
      %p113 = scmp.eq.s32.totalorder %s28, 1
      %p114 = por %p112, %p113
      %p116 = scmp.ne.s32.totalorder %s101, %s115
      %p117 = scmp.eq.s32.totalorder %s28, 0
      %p118 = por %p116, %p117
      %s120 = sadd.s32 %s119, 1
      %p123 = scmp.eq.s32.totalorder %s22, 1
      %p124 = scmp.ne.s32.totalorder %s119, %s121
      %p125 = scmp.eq.s32.totalorder %s22, 0
      %p126 = por %p124, %p125
      %p127 = scmp.ne.s32.totalorder %s119, %s121
      %p128 = scmp.eq.s32.totalorder %s27, 1
      %p129 = por %p127, %p128
      %p130 = scmp.ne.s32.totalorder %s121, %s122
      %p131 = scmp.eq.s32.totalorder %s27, 0
      %p132 = por %p130, %p131
      %p133 = scmp.ne.s32.totalorder %s121, %s122
      %p134 = scmp.eq.s32.totalorder %s28, 1
      %p135 = por %p133, %p134
      %p137 = scmp.ne.s32.totalorder %s122, %s136
      %p138 = scmp.eq.s32.totalorder %s28, 0
      %p139 = por %p137, %p138
      %s141 = sadd.s32 %s140, 1
      %p144 = scmp.eq.s32.totalorder %s22, 1
      %p145 = scmp.ne.s32.totalorder %s140, %s142
      %p146 = scmp.eq.s32.totalorder %s22, 0
      %p147 = por %p145, %p146
      %p148 = scmp.ne.s32.totalorder %s140, %s142
      %p149 = scmp.eq.s32.totalorder %s27, 1
      %p150 = por %p148, %p149
      %p151 = scmp.ne.s32.totalorder %s142, %s143
      %p152 = scmp.eq.s32.totalorder %s27, 0
      %p153 = por %p151, %p152
      %p154 = scmp.ne.s32.totalorder %s142, %s143
      %p155 = scmp.eq.s32.totalorder %s28, 1
      %p156 = por %p154, %p155
      %p158 = scmp.ne.s32.totalorder %s143, %s157
      %p159 = scmp.eq.s32.totalorder %s28, 0
      %p160 = por %p158, %p159
      %s161 = ssub.s32 %s22, %s29
      %p162 = scmp.eq.s32.totalorder %s161, 0
      %s164 = sadd.s32 %s163, 1
      %s165 = scalar_select %p162, %s163, %s164
      %p168 = pneg %p162
      %p169 = scmp.eq.s32.totalorder %s22, 1
      %p170 = por %p168, %p169
      %p171 = scmp.ne.s32.totalorder %s163, %s166
      %p172 = scmp.eq.s32.totalorder %s22, 0
      %p173 = por %p171, %p172
      %p174 = scmp.ne.s32.totalorder %s163, %s166
      %p175 = scmp.eq.s32.totalorder %s27, 1
      %p176 = por %p174, %p175
      %p177 = scmp.ne.s32.totalorder %s166, %s167
      %p178 = scmp.eq.s32.totalorder %s27, 0
      %p179 = por %p177, %p178
      %p180 = scmp.ne.s32.totalorder %s166, %s167
      %p181 = scmp.eq.s32.totalorder %s28, 1
      %p182 = por %p180, %p181
      %p184 = scmp.ne.s32.totalorder %s167, %s183
      %p185 = scmp.eq.s32.totalorder %s28, 0
      %p186 = por %p184, %p185
      %s187 = ssub.s32 %s22, %s29
      %p188 = scmp.eq.s32.totalorder %s187, 0
      %s190 = sadd.s32 %s189, 1
      %s191 = scalar_select %p188, %s189, %s190
      %p194 = pneg %p188
      %p195 = scmp.eq.s32.totalorder %s22, 1
      %p196 = por %p194, %p195
      %p197 = scmp.ne.s32.totalorder %s189, %s192
      %p198 = scmp.eq.s32.totalorder %s22, 0
      %p199 = por %p197, %p198
      %p200 = scmp.ne.s32.totalorder %s189, %s192
      %p201 = scmp.eq.s32.totalorder %s27, 1
      %p202 = por %p200, %p201
      %p203 = scmp.ne.s32.totalorder %s192, %s193
      %p204 = scmp.eq.s32.totalorder %s27, 0
      %p205 = por %p203, %p204
      %p206 = scmp.ne.s32.totalorder %s192, %s193
      %p207 = scmp.eq.s32.totalorder %s28, 1
      %p208 = por %p206, %p207
      %p210 = scmp.ne.s32.totalorder %s193, %s209
      %p211 = scmp.eq.s32.totalorder %s28, 0
      %p212 = por %p210, %p211
      %p213 = scmp.le.s32.totalorder 1, %s22
      %p214 = scmp.lt.s32.totalorder %s22, 3
      %p215 = pnand %p213, %p214
      %p216 = pneg %p215
      // Predicated region
      $region9: #{tpu_custom_call.1} parent=5 // pred_check
        _
      $region10: #{tpu_custom_call.1} parent=5 // pred_check_branch
        %218 = sbr.rel (%p215) target = $region12
      $region11: #{tpu_custom_call.1} parent=5 // pred_region
        %s219 = ssub.s32 %s22, 1
        // Predicated region
        $region13: #{tpu_custom_call.1} parent=11 // pred_check
          %p220 = pneg %p69
        $region14: #{tpu_custom_call.1} parent=11 // pred_check_branch
          %222 = sbr.rel (%p220) target = $region16
        $region15: #{tpu_custom_call.1} parent=11 // pred_region
          _
        $region16: #{tpu_custom_call.1} parent=11 // pred_fallthru
          _
        // Predicated region
        $region17: #{tpu_custom_call.1} parent=11 // pred_check
          %p223 = pneg %p90
        $region18: #{tpu_custom_call.1} parent=11 // pred_check_branch
          %225 = sbr.rel (%p223) target = $region20
        $region19: #{tpu_custom_call.1} parent=11 // pred_region
          _
        $region20: #{tpu_custom_call.1} parent=11 // pred_fallthru
          _
        // Predicated region
        $region21: #{tpu_custom_call.1} parent=11 // pred_check
          %p226 = pneg %p111
        $region22: #{tpu_custom_call.1} parent=11 // pred_check_branch
          %228 = sbr.rel (%p226) target = $region24
        $region23: #{tpu_custom_call.1} parent=11 // pred_region
          %230 = vsyncadd [#allocation3], 0
          %s231 = sshll.u32 %s3, 4
          %s232 = int_to_ptr.hbm [resolvable:$true] %s231
          %s233 = sshll.u32 [#allocation2], 4
          %s234 = int_to_ptr.vmem [resolvable:$true] %s233
          %239 = dma.hbm_to_vmem [thread:$0]  %s232, 1024, %s234, [#allocation3], 64, 64, 4
        $region24: #{tpu_custom_call.1} parent=11 // pred_fallthru
          _
        // Predicated region
        $region25: #{tpu_custom_call.1} parent=11 // pred_check
          %p240 = pneg %p132
        $region26: #{tpu_custom_call.1} parent=11 // pred_check_branch
          %242 = sbr.rel (%p240) target = $region28
        $region27: #{tpu_custom_call.1} parent=11 // pred_region
          %244 = vsyncadd [#allocation6], 0
          %s245 = sshll.u32 %s4, 4
          %s246 = int_to_ptr.hbm [resolvable:$true] %s245
          %s247 = sshll.u32 [#allocation5], 4
          %s248 = int_to_ptr.vmem [resolvable:$true] %s247
          %253 = dma.hbm_to_vmem [thread:$0]  %s246, 1024, %s248, [#allocation6], 64, 64, 4
        $region28: #{tpu_custom_call.1} parent=11 // pred_fallthru
          _
        // Predicated region
        $region29: #{tpu_custom_call.1} parent=11 // pred_check
          %p254 = pneg %p153
        $region30: #{tpu_custom_call.1} parent=11 // pred_check_branch
          %256 = sbr.rel (%p254) target = $region32
        $region31: #{tpu_custom_call.1} parent=11 // pred_region
          _
        $region32: #{tpu_custom_call.1} parent=11 // pred_fallthru
          _
      $region12: #{tpu_custom_call.1} parent=5 // pred_fallthru
        _
      %p257 = scmp.lt.s32.totalorder %s22, 2
      // Predicated region
      $region33: #{tpu_custom_call.1} parent=5 // pred_check
        %p258 = pneg %p257
      $region34: #{tpu_custom_call.1} parent=5 // pred_check_branch
        %260 = sbr.rel (%p258) target = $region36
      $region35: #{tpu_custom_call.1} parent=5 // pred_region
        // Predicated region
        $region37: #{tpu_custom_call.1} parent=35 // pred_check
          %p261 = pneg %p42
        $region38: #{tpu_custom_call.1} parent=35 // pred_check_branch
          %263 = sbr.rel (%p261) target = $region40
        $region39: #{tpu_custom_call.1} parent=35 // pred_region
          %p264 = scmp.lt.s32.totalorder %s22, 1
          %s265 = scalar_select %p264, %s22, 1
          %s266 = smul.addr %s265, 4
          %s267 = smul.addr %s266, 4
          %s268 = scalar_lea.vmem %s0, %s267
        $region40: #{tpu_custom_call.1} parent=35 // pred_fallthru
          _
      $region36: #{tpu_custom_call.1} parent=5 // pred_fallthru
        _
      %p269 = scmp.le.s32.totalorder 1, %s22
      %p270 = scmp.lt.s32.totalorder %s22, 3
      %p271 = pnand %p269, %p270
      %p272 = pneg %p271
      // Predicated region
      $region41: #{tpu_custom_call.1} parent=5 // pred_check
        _
      $region42: #{tpu_custom_call.1} parent=5 // pred_check_branch
        %274 = sbr.rel (%p271) target = $region44
      $region43: #{tpu_custom_call.1} parent=5 // pred_region
        %s275 = ssub.s32 %s22, 1
        // Predicated region
        $region45: #{tpu_custom_call.1} parent=43 // pred_check
          %p276 = pneg %p111
        $region46: #{tpu_custom_call.1} parent=43 // pred_check_branch
          %278 = sbr.rel (%p276) target = $region48
        $region47: #{tpu_custom_call.1} parent=43 // pred_region
          %280 = dma.done [#allocation3], 1024
        $region48: #{tpu_custom_call.1} parent=43 // pred_fallthru
          _
        // Predicated region
        $region49: #{tpu_custom_call.1} parent=43 // pred_check
          %p281 = pneg %p132
        $region50: #{tpu_custom_call.1} parent=43 // pred_check_branch
          %283 = sbr.rel (%p281) target = $region52
        $region51: #{tpu_custom_call.1} parent=43 // pred_region
          %285 = dma.done [#allocation6], 1024
        $region52: #{tpu_custom_call.1} parent=43 // pred_fallthru
          _
        %p286 = scmp.lt.s32.totalorder %s27, 1
        %s287 = scalar_select %p286, %s27, 1
        %s288 = smul.addr %s287, 4
        %s289 = smul.addr %s288, 4
        %s290 = scalar_lea.vmem %s0, %s289
        %p291 = pneg %p48
        %p292 = pneg %p45
        %p293 = pneg %p69
        %p294 = pneg %p66
        %p295 = pneg %p90
        %p296 = pneg %p87
        %p297 = pneg %p111
        %p298 = pneg %p108
        %p299 = pneg %p132
        %p300 = pneg %p129
        %p301 = pneg %p153
        %p302 = pneg %p150
        %p303 = pneg %p179
        %p304 = pneg %p176
        %s305 = sand.u32 %s166, 1
        %s306 = scalar_lea.sflag [#allocation4], %s305
        %s307 = sand.u32 %s166, 1
        %s308 = smul.addr %s307, 16
        %s309 = scalar_lea.vmem [#allocation7], %s308
        %p310 = pneg %p205
        %p311 = pneg %p202
        %s312 = sand.u32 %s192, 1
        %s313 = scalar_lea.sflag [#allocation9], %s312
        %s314 = sand.u32 %s192, 1
        %s315 = smul.addr %s314, 16
        %s316 = scalar_lea.vmem [#allocation8], %s315
        %p317 = scmp.lt.s32.totalorder %s27, 1
        %s318 = scalar_select %p317, %s27, 1
        %s319 = smul.addr %s318, 4
        %s320 = smul.addr %s319, 4
        %s321 = scalar_lea.vmem %s0, %s320
        %v323 = vld [vmem:[%s321] sm:$0xf]
        %v324 = vld [vmem:[%s321 + $0x4] sm:$0xf]
        %v325 = vld [vmem:[%s321 + $0x8] sm:$0xf]
        %v326 = vld [vmem:[%s321 + $0xc] sm:$0xf]
        %v327 = vld [vmem:[%s1] sm:$0x3]
        %v332 = vunpack.c.l.b16 %v323
        %v333 = vunpack.c.l.b16 %v324
        %v334 = vunpack.c.l.b16 %v325
        %v335 = vunpack.c.l.b16 %v326
        %v336 = vpack.c.b16 %v333, %v332
        %v337 = vpack.c.b16 %v335, %v334
        %vm338 = vcmask 31744
        %v340 = vsel %vm338, %v336, 0
        %v343 = vsel %vm338, %v337, 0
        %vm345 = vcmask 1041408
        %v347 = vsel %vm345, %v327, 0
        %349 = vmatpush.bf16.msra.mxu0 0
        %350 = vmatpush.bf16.msra.mxu0 0
        %351 = vmatpush.bf16.msra.mxu0 0
        %352 = vmatpush.bf16.msra.mxu0 0
        %353 = vmatpush.bf16.msra.mxu0 0
        %354 = vmatpush.bf16.msra.mxu0 0
        %355 = vmatpush.bf16.msra.mxu0 0
        %356 = vmatpush.bf16.msra.mxu0 %v347
        %357 = vmatmul.bf16.gmra.mxu0 %v340
        %v358 = vpop.f32.mrf.mxu0
        %v359 = vadd.f32 0.0, %v358
        %v360 = vpop.f32.mrf.mxu0
        %v361 = vadd.f32 0.0, %v360
        %362 = vmatmul.bf16.gmra.mxu0 %v343
        %v363 = vpop.f32.mrf.mxu0
        %v364 = vadd.f32 0.0, %v363
        %v365 = vpop.f32.mrf.mxu0
        %v366 = vadd.f32 0.0, %v365
        %367 = vdwg.mxu0
        %v368 = vmul.f32 %v359, %v359
        %v369 = vmul.f32 %v361, %v361
        %v370 = vmul.f32 %v364, %v364
        %v371 = vmul.f32 %v366, %v366
        %v372 = vmul.f32 %v359, %v368
        %v373 = vmul.f32 %v361, %v369
        %v374 = vmul.f32 %v364, %v370
        %v375 = vmul.f32 %v366, %v371
        %v376 = vmul.f32 %v372, 0.044715
        %v377 = vmul.f32 %v373, 0.044715
        %v378 = vmul.f32 %v374, 0.044715
        %v379 = vmul.f32 %v375, 0.044715
        %v380 = vadd.f32 %v359, %v376
        %v381 = vadd.f32 %v361, %v377
        %v382 = vadd.f32 %v364, %v378
        %v383 = vadd.f32 %v366, %v379
        %v384 = vmul.f32 %v380, 0.7978846
        %v385 = vmul.f32 %v381, 0.7978846
        %v386 = vmul.f32 %v382, 0.7978846
        %v387 = vmul.f32 %v383, 0.7978846
        %v388 = vtanh.pop %v384
        %v389 = vtanh.pop %v385
        %v390 = vtanh.pop %v386
        %v391 = vtanh.pop %v387
        %v392 = vadd.f32 %v388, 1.0
        %v393 = vadd.f32 %v389, 1.0
        %v394 = vadd.f32 %v390, 1.0
        %v395 = vadd.f32 %v391, 1.0
        %v396 = vmul.f32 %v392, 0.5
        %v397 = vmul.f32 %v393, 0.5
        %v398 = vmul.f32 %v394, 0.5
        %v399 = vmul.f32 %v395, 0.5
        %v400 = vmul.f32 %v359, %v396
        %v401 = vmul.f32 %v361, %v397
        %v402 = vmul.f32 %v364, %v398
        %v403 = vmul.f32 %v366, %v399
        %v404 = vpack.c.bf16 %v400, %v400
        %v405 = vpack.c.bf16 %v401, %v401
        %v406 = vpack.c.bf16 %v402, %v402
        %v407 = vpack.c.bf16 %v403, %v403
        %408 = vst [vmem:[%s309] sm:$0xf] %v404
        %409 = vst [vmem:[%s309 + $0x4] sm:$0xf] %v405
        %410 = vst [vmem:[%s309 + $0x8] sm:$0xf] %v406
        %411 = vst [vmem:[%s309 + $0xc] sm:$0xf] %v407
        %v412 = vld [vmem:[%s309] sm:$0xf]
        %v413 = vld [vmem:[%s309 + $0x4] sm:$0xf]
        %v414 = vld [vmem:[%s309 + $0x8] sm:$0xf]
        %v415 = vld [vmem:[%s309 + $0xc] sm:$0xf]
        %v416 = vld [vmem:[%s321] sm:$0xf]
        %v417 = vld [vmem:[%s321 + $0x4] sm:$0xf]
        %v418 = vld [vmem:[%s321 + $0x8] sm:$0xf]
        %v419 = vld [vmem:[%s321 + $0xc] sm:$0xf]
        %v420 = vld [vmem:[%s2] sm:$0x3]
        %v425 = vunpack.c.l.b16 %v416
        %v426 = vunpack.c.l.b16 %v417
        %v427 = vunpack.c.l.b16 %v418
        %v428 = vunpack.c.l.b16 %v419
        %v429 = vpack.c.b16 %v426, %v425
        %v430 = vpack.c.b16 %v428, %v427
        %v432 = vsel %vm338, %v429, 0
        %v435 = vsel %vm338, %v430, 0
        %v438 = vsel %vm345, %v420, 0
        %440 = vmatpush.bf16.msra.mxu0 0
        %441 = vmatpush.bf16.msra.mxu0 0
        %442 = vmatpush.bf16.msra.mxu0 0
        %443 = vmatpush.bf16.msra.mxu0 0
        %444 = vmatpush.bf16.msra.mxu0 0
        %445 = vmatpush.bf16.msra.mxu0 0
        %446 = vmatpush.bf16.msra.mxu0 0
        %447 = vmatpush.bf16.msra.mxu0 %v438
        %448 = vmatmul.bf16.gmra.mxu0 %v432
        %v449 = vpop.f32.mrf.mxu0
        %v450 = vadd.f32 0.0, %v449
        %v451 = vpop.f32.mrf.mxu0
        %v452 = vadd.f32 0.0, %v451
        %453 = vmatmul.bf16.gmra.mxu0 %v435
        %v454 = vpop.f32.mrf.mxu0
        %v455 = vadd.f32 0.0, %v454
        %v456 = vpop.f32.mrf.mxu0
        %v457 = vadd.f32 0.0, %v456
        %458 = vdwg.mxu0
        %v459 = vmul.f32 %v450, %v450
        %v460 = vmul.f32 %v452, %v452
        %v461 = vmul.f32 %v455, %v455
        %v462 = vmul.f32 %v457, %v457
        %v463 = vmul.f32 %v450, %v459
        %v464 = vmul.f32 %v452, %v460
        %v465 = vmul.f32 %v455, %v461
        %v466 = vmul.f32 %v457, %v462
        %v467 = vmul.f32 %v463, 0.044715
        %v468 = vmul.f32 %v464, 0.044715
        %v469 = vmul.f32 %v465, 0.044715
        %v470 = vmul.f32 %v466, 0.044715
        %v471 = vadd.f32 %v450, %v467
        %v472 = vadd.f32 %v452, %v468
        %v473 = vadd.f32 %v455, %v469
        %v474 = vadd.f32 %v457, %v470
        %v475 = vmul.f32 %v471, 0.7978846
        %v476 = vmul.f32 %v472, 0.7978846
        %v477 = vmul.f32 %v473, 0.7978846
        %v478 = vmul.f32 %v474, 0.7978846
        %v479 = vtanh.pop %v475
        %v480 = vtanh.pop %v476
        %v481 = vtanh.pop %v477
        %v482 = vtanh.pop %v478
        %v483 = vadd.f32 %v479, 1.0
        %v484 = vadd.f32 %v480, 1.0
        %v485 = vadd.f32 %v481, 1.0
        %v486 = vadd.f32 %v482, 1.0
        %v487 = vmul.f32 %v483, 0.5
        %v488 = vmul.f32 %v484, 0.5
        %v489 = vmul.f32 %v485, 0.5
        %v490 = vmul.f32 %v486, 0.5
        %v491 = vmul.f32 %v450, %v487
        %v492 = vmul.f32 %v452, %v488
        %v493 = vmul.f32 %v455, %v489
        %v494 = vmul.f32 %v457, %v490
        %v495 = vld [vmem:[#allocation2] sm:$0xf]
        %v496 = vld [vmem:[#allocation2 + $0x4] sm:$0xf]
        %v497 = vld [vmem:[#allocation2 + $0x8] sm:$0xf]
        %v498 = vld [vmem:[#allocation2 + $0xc] sm:$0xf]
        %v499 = vld [vmem:[#allocation2 + $0x10] sm:$0xf]
        %v500 = vld [vmem:[#allocation2 + $0x14] sm:$0xf]
        %v501 = vld [vmem:[#allocation2 + $0x18] sm:$0xf]
        %v502 = vld [vmem:[#allocation2 + $0x1c] sm:$0xf]
        %v503 = vld [vmem:[#allocation2 + $0x20] sm:$0xf]
        %v504 = vld [vmem:[#allocation2 + $0x24] sm:$0xf]
        %v505 = vld [vmem:[#allocation2 + $0x28] sm:$0xf]
        %v506 = vld [vmem:[#allocation2 + $0x2c] sm:$0xf]
        %v507 = vld [vmem:[#allocation2 + $0x30] sm:$0xf]
        %v508 = vld [vmem:[#allocation2 + $0x34] sm:$0xf]
        %v509 = vld [vmem:[#allocation2 + $0x38] sm:$0xf]
        %v510 = vld [vmem:[#allocation2 + $0x3c] sm:$0xf]
        %v511 = vpack.c.bf16 %v492, %v491
        %v512 = vpack.c.bf16 %v494, %v493
        %v513 = vld [vmem:[#allocation5] sm:$0xf]
        %v514 = vld [vmem:[#allocation5 + $0x4] sm:$0xf]
        %v515 = vld [vmem:[#allocation5 + $0x8] sm:$0xf]
        %v516 = vld [vmem:[#allocation5 + $0xc] sm:$0xf]
        %v517 = vld [vmem:[#allocation5 + $0x10] sm:$0xf]
        %v518 = vld [vmem:[#allocation5 + $0x14] sm:$0xf]
        %v519 = vld [vmem:[#allocation5 + $0x18] sm:$0xf]
        %v520 = vld [vmem:[#allocation5 + $0x1c] sm:$0xf]
        %v521 = vld [vmem:[#allocation5 + $0x20] sm:$0xf]
        %v522 = vld [vmem:[#allocation5 + $0x24] sm:$0xf]
        %v523 = vld [vmem:[#allocation5 + $0x28] sm:$0xf]
        %v524 = vld [vmem:[#allocation5 + $0x2c] sm:$0xf]
        %v525 = vld [vmem:[#allocation5 + $0x30] sm:$0xf]
        %v526 = vld [vmem:[#allocation5 + $0x34] sm:$0xf]
        %v527 = vld [vmem:[#allocation5 + $0x38] sm:$0xf]
        %v528 = vld [vmem:[#allocation5 + $0x3c] sm:$0xf]
        %v545 = vunpack.c.l.b16 %v513
        %v546 = vunpack.c.l.b16 %v514
        %v547 = vunpack.c.l.b16 %v515
        %v548 = vunpack.c.l.b16 %v516
        %v549 = vunpack.c.l.b16 %v517
        %v550 = vunpack.c.l.b16 %v518
        %v551 = vunpack.c.l.b16 %v519
        %v552 = vunpack.c.l.b16 %v520
        %v553 = vunpack.c.l.b16 %v521
        %v554 = vunpack.c.l.b16 %v522
        %v555 = vunpack.c.l.b16 %v523
        %v556 = vunpack.c.l.b16 %v524
        %v557 = vunpack.c.l.b16 %v525
        %v558 = vunpack.c.l.b16 %v526
        %v559 = vunpack.c.l.b16 %v527
        %v560 = vunpack.c.l.b16 %v528
        %v561 = vpack.c.b16 %v546, %v545
        %v562 = vpack.c.b16 %v548, %v547
        %v563 = vpack.c.b16 %v550, %v549
        %v564 = vpack.c.b16 %v552, %v551
        %v565 = vpack.c.b16 %v554, %v553
        %v566 = vpack.c.b16 %v556, %v555
        %v567 = vpack.c.b16 %v558, %v557
        %v568 = vpack.c.b16 %v560, %v559
        %577 = vmatpush.bf16.msra.mxu0 %v568
        %578 = vmatpush.bf16.msra.mxu0 %v567
        %579 = vmatpush.bf16.msra.mxu0 %v566
        %580 = vmatpush.bf16.msra.mxu0 %v565
        %581 = vmatpush.bf16.msra.mxu0 %v564
        %582 = vmatpush.bf16.msra.mxu0 %v563
        %583 = vmatpush.bf16.msra.mxu0 %v562
        %584 = vmatpush.bf16.msra.mxu0 %v561
        %585 = vmatmul.bf16.gmra.mxu0 %v511
        %v586 = vpop.f32.mrf.mxu0
        %v587 = vadd.f32 0.0, %v586
        %v588 = vpop.f32.mrf.mxu0
        %v589 = vadd.f32 0.0, %v588
        %590 = vmatmul.bf16.gmra.mxu0 %v512
        %v591 = vpop.f32.mrf.mxu0
        %v592 = vadd.f32 0.0, %v591
        %v593 = vpop.f32.mrf.mxu0
        %v594 = vadd.f32 0.0, %v593
        %595 = vdwg.mxu0
        %v600 = vunpack.c.l.b16 %v412
        %v601 = vunpack.c.l.b16 %v413
        %v602 = vunpack.c.l.b16 %v414
        %v603 = vunpack.c.l.b16 %v415
        %v604 = vpack.c.b16 %v601, %v600
        %v605 = vpack.c.b16 %v603, %v602
        %v624 = vunpack.c.l.b16 %v495
        %v625 = vunpack.c.l.b16 %v496
        %v626 = vunpack.c.l.b16 %v497
        %v627 = vunpack.c.l.b16 %v498
        %v628 = vunpack.c.l.b16 %v499
        %v629 = vunpack.c.l.b16 %v500
        %v630 = vunpack.c.l.b16 %v501
        %v631 = vunpack.c.l.b16 %v502
        %v632 = vunpack.c.l.b16 %v503
        %v633 = vunpack.c.l.b16 %v504
        %v634 = vunpack.c.l.b16 %v505
        %v635 = vunpack.c.l.b16 %v506
        %v636 = vunpack.c.l.b16 %v507
        %v637 = vunpack.c.l.b16 %v508
        %v638 = vunpack.c.l.b16 %v509
        %v639 = vunpack.c.l.b16 %v510
        %v640 = vpack.c.b16 %v625, %v624
        %v641 = vpack.c.b16 %v627, %v626
        %v642 = vpack.c.b16 %v629, %v628
        %v643 = vpack.c.b16 %v631, %v630
        %v644 = vpack.c.b16 %v633, %v632
        %v645 = vpack.c.b16 %v635, %v634
        %v646 = vpack.c.b16 %v637, %v636
        %v647 = vpack.c.b16 %v639, %v638
        %656 = vmatpush.bf16.msra.mxu0 %v647
        %657 = vmatpush.bf16.msra.mxu0 %v646
        %658 = vmatpush.bf16.msra.mxu0 %v645
        %659 = vmatpush.bf16.msra.mxu0 %v644
        %660 = vmatpush.bf16.msra.mxu0 %v643
        %661 = vmatpush.bf16.msra.mxu0 %v642
        %662 = vmatpush.bf16.msra.mxu0 %v641
        %663 = vmatpush.bf16.msra.mxu0 %v640
        %664 = vmatmul.bf16.gmra.mxu0 %v604
        %v665 = vpop.f32.mrf.mxu0
        %v666 = vadd.f32 %v587, %v665
        %v667 = vpop.f32.mrf.mxu0
        %v668 = vadd.f32 %v589, %v667
        %669 = vmatmul.bf16.gmra.mxu0 %v605
        %v670 = vpop.f32.mrf.mxu0
        %v671 = vadd.f32 %v592, %v670
        %v672 = vpop.f32.mrf.mxu0
        %v673 = vadd.f32 %v594, %v672
        %674 = vdwg.mxu0
        %v675 = vld [vmem:[%s5] sm:$0x1]
        %v677 = vperm.slane %v675, 0
        %v679 = vadd.f32 %v666, %v677
        %v680 = vadd.f32 %v668, %v677
        %v681 = vadd.f32 %v671, %v677
        %v682 = vadd.f32 %v673, %v677
        %v683 = vadd.f32 %v491, %v679
        %v684 = vadd.f32 %v492, %v680
        %v685 = vadd.f32 %v493, %v681
        %v686 = vadd.f32 %v494, %v682
        %v687 = vpack.c.bf16 %v683, %v683
        %v688 = vpack.c.bf16 %v684, %v684
        %v689 = vpack.c.bf16 %v685, %v685
        %v690 = vpack.c.bf16 %v686, %v686
        %691 = vst [vmem:[%s316] sm:$0xf] %v687
        %692 = vst [vmem:[%s316 + $0x4] sm:$0xf] %v688
        %693 = vst [vmem:[%s316 + $0x8] sm:$0xf] %v689
        %694 = vst [vmem:[%s316 + $0xc] sm:$0xf] %v690
        %s695 = sand.u32 %s166, 1
        %s696 = scalar_lea.sflag [#allocation4], %s695
        %s697 = sand.u32 %s166, 1
        %s698 = smul.addr %s697, 16
        %s699 = scalar_lea.vmem [#allocation7], %s698
        %s700 = sand.u32 %s192, 1
        %s701 = scalar_lea.sflag [#allocation9], %s700
        %s702 = sand.u32 %s192, 1
        %s703 = smul.addr %s702, 16
        %s704 = scalar_lea.vmem [#allocation8], %s703
        // Predicated region
        $region53: #{tpu_custom_call.1} parent=43 // pred_check
          %p705 = pneg %p176
        $region54: #{tpu_custom_call.1} parent=43 // pred_check_branch
          %707 = sbr.rel (%p705) target = $region56
        $region55: #{tpu_custom_call.1} parent=43 // pred_region
          %709 = vsyncadd %s696, 0
          %s710 = smul.addr %s27, 4
          %s711 = smul.addr %s710, 4
          %s712 = scalar_lea.hbm %s6, %s711
          %s713 = sshll.u32 %s699, 4
          %s714 = int_to_ptr.vmem [resolvable:$true] %s713
          %s715 = sshll.u32 %s712, 4
          %s716 = int_to_ptr.hbm [resolvable:$true] %s715
          %721 = dma.vmem_to_hbm [thread:$0]  %s714, 256, %s716, %s696, 64, 64, 4
        $region56: #{tpu_custom_call.1} parent=43 // pred_fallthru
          _
        // Predicated region
        $region57: #{tpu_custom_call.1} parent=43 // pred_check
          %p722 = pneg %p202
        $region58: #{tpu_custom_call.1} parent=43 // pred_check_branch
          %724 = sbr.rel (%p722) target = $region60
        $region59: #{tpu_custom_call.1} parent=43 // pred_region
          %726 = vsyncadd %s701, 0
          %s727 = smul.addr %s27, 4
          %s728 = smul.addr %s727, 4
          %s729 = scalar_lea.hbm %s7, %s728
          %s730 = sshll.u32 %s704, 4
          %s731 = int_to_ptr.vmem [resolvable:$true] %s730
          %s732 = sshll.u32 %s729, 4
          %s733 = int_to_ptr.hbm [resolvable:$true] %s732
          %738 = dma.vmem_to_hbm [thread:$0]  %s731, 256, %s733, %s701, 64, 64, 4
        $region60: #{tpu_custom_call.1} parent=43 // pred_fallthru
          _
      $region44: #{tpu_custom_call.1} parent=5 // pred_fallthru
        _
      %p739 = scmp.le.s32.totalorder 2, %s22
      // Predicated region
      $region61: #{tpu_custom_call.1} parent=5 // pred_check
        %p740 = pneg %p739
      $region62: #{tpu_custom_call.1} parent=5 // pred_check_branch
        %742 = sbr.rel (%p740) target = $region64
      $region63: #{tpu_custom_call.1} parent=5 // pred_region
        %s743 = ssub.s32 %s22, 2
        // Predicated region
        $region65: #{tpu_custom_call.1} parent=63 // pred_check
          %p744 = pneg %p182
        $region66: #{tpu_custom_call.1} parent=63 // pred_check_branch
          %746 = sbr.rel (%p744) target = $region68
        $region67: #{tpu_custom_call.1} parent=63 // pred_region
          %s747 = sand.u32 %s167, 1
          %s748 = scalar_lea.sflag [#allocation4], %s747
          %s749 = sand.u32 %s167, 1
          %s750 = smul.addr %s749, 16
          %s751 = scalar_lea.vmem [#allocation7], %s750
          %753 = dma.done %s748, 256
        $region68: #{tpu_custom_call.1} parent=63 // pred_fallthru
          _
        // Predicated region
        $region69: #{tpu_custom_call.1} parent=63 // pred_check
          %p754 = pneg %p208
        $region70: #{tpu_custom_call.1} parent=63 // pred_check_branch
          %756 = sbr.rel (%p754) target = $region72
        $region71: #{tpu_custom_call.1} parent=63 // pred_region
          %s757 = sand.u32 %s193, 1
          %s758 = scalar_lea.sflag [#allocation9], %s757
          %s759 = sand.u32 %s193, 1
          %s760 = smul.addr %s759, 16
          %s761 = scalar_lea.vmem [#allocation8], %s760
          %763 = dma.done %s758, 256
        $region72: #{tpu_custom_call.1} parent=63 // pred_fallthru
          _
      $region64: #{tpu_custom_call.1} parent=5 // pred_fallthru
        _
    $region6: #{tpu_custom_call.1} parent=1 // loop_footer
      %s26 = sadd.s32 1, %s22
    $region7: #{tpu_custom_call.1} parent=1 // loop_footer_branch
      %21 = sbr.rel target = $region3
    $region8: #{tpu_custom_call.1} parent=1 // loop_exit
      _
    %764 = vsyncpa [#allocation3], 1
    %s765 = scalar_lea.sflag [#allocation3], 1
    %766 = vsyncpa %s765, 1
    %767 = vsyncpa [#allocation6], 1
    %768 = vsyncpa [#allocation4], 1
    %s769 = scalar_lea.sflag [#allocation4], 1
    %770 = vsyncpa %s769, 1
    %771 = vsyncpa [#allocation9], 1
    %s772 = scalar_lea.sflag [#allocation9], 1
    %773 = vsyncpa %s772, 1

// kernel: tpu_custom_call.1
$region0: #{tpu_custom_call.1}
  #allocation0 [shape = 'u32[]', space=smem, size = 0x4, offset = 0x4, fixed_abs, tag = 'smem constant byte address 0x4 - core index']
  #allocation1 [shape = 'u32[72,128]{1,0:T(1,128)}', space=vmem, size = 0x9000, scoped, tag = 'internal scratch']
  %s0 = inlined_call_operand.vmem [shape: bf16[2,32,4], index: 0, kind: input, shape index: {}]
  %s1 = inlined_call_operand.vmem [shape: bf16[4,128], index: 1, kind: input, shape index: {}]
  %s2 = inlined_call_operand.vmem [shape: bf16[4,128], index: 2, kind: input, shape index: {}]
  %s3 = inlined_call_operand.hbm [shape: bf16[128,128], index: 3, kind: input, shape index: {}]
  %s4 = inlined_call_operand.hbm [shape: bf16[128,128], index: 4, kind: input, shape index: {}]
  %s5 = inlined_call_operand.vmem [shape: f32[1,128], index: 5, kind: input, shape index: {}]
  %s6 = inlined_call_operand.hbm [shape: bf16[2,32,128], index: 6, kind: output, shape index: {0}]
  %s7 = inlined_call_operand.hbm [shape: bf16[2,32,128], index: 7, kind: output, shape index: {1}]
  %8 = xla_tuple %s6, %s7
  %s9 = sld [smem:[#allocation0]]
  $region73: #{tpu_custom_call.1} parent=0
    _
  %s11 = ssub.s32 1, %s9
  %s12 = scalar_select 0, %s11, %s9
  $region1: #{tpu_custom_call.1} parent=0
    #allocation2 [shape = 'u8[32768]{0}', space=vmem, size = 0x8000, scoped, tag = 'input window, operand 3, single buffered']
    #allocation3 [shape = 's32[2]{0}', space=sflag, size = 0x8, scoped, tag = 'scoped memory for tpu_custom_call.1']
    #allocation4 [shape = 's32[2]{0}', space=sflag, size = 0x8, scoped, tag = 'scoped memory for tpu_custom_call.1']
    #allocation5 [shape = 'u8[32768]{0}', space=vmem, size = 0x8000, scoped, tag = 'input window, operand 4, single buffered']
    #allocation6 [shape = 's32[1]{0}', space=sflag, size = 0x4, scoped, tag = 'scoped memory for tpu_custom_call.1']
    #allocation7 [shape = 'u8[16384]{0}', space=vmem, size = 0x4000, scoped, tag = 'output window, operand 0']
    #allocation8 [shape = 'u8[16384]{0}', space=vmem, size = 0x4000, scoped, tag = 'output window, operand 1']
    #allocation9 [shape = 's32[2]{0}', space=sflag, size = 0x8, scoped, tag = 'scoped memory for tpu_custom_call.1']
    %13 = vsyncpa [#allocation3], 0
    %14 = vsyncpa [#allocation6], 0
    %15 = vsyncpa [#allocation4], 0
    %s16 = scalar_lea.sflag [#allocation4], 1
    %17 = vsyncpa %s16, 0
    %18 = vsyncpa [#allocation9], 0
    %s19 = scalar_lea.sflag [#allocation9], 1
    %20 = vsyncpa %s19, 0
    loop: start=0, step=1, limit=4
    $region2: #{tpu_custom_call.1} parent=1 // loop_pre_header
      _
    $region3: #{tpu_custom_call.1} parent=1 // loop_header
      %s22 = sphi 0, %s26
      %p23 = scmp.ge.s32.totalorder %s22, 4
      %s32 = sphi 0, %s34
      %s35 = sphi 0, %s32
      %s36 = sphi 0, %s35
      %s52 = sphi 0, %s36
      %s56 = sphi 0, %s56
      %s58 = sphi 0, %s56
      %s59 = sphi 0, %s58
      %s73 = sphi 0, %s59
      %s77 = sphi 0, %s77
      %s79 = sphi 0, %s77
      %s80 = sphi 0, %s79
      %s94 = sphi 0, %s80
      %s98 = sphi 0, %s98
      %s100 = sphi 0, %s98
      %s101 = sphi 0, %s100
      %s115 = sphi 0, %s101
      %s119 = sphi 0, %s119
      %s121 = sphi 0, %s119
      %s122 = sphi 0, %s121
      %s136 = sphi 0, %s122
      %s140 = sphi 0, %s140
      %s142 = sphi 0, %s140
      %s143 = sphi 0, %s142
      %s157 = sphi 0, %s143
      %s163 = sphi 0, %s165
      %s166 = sphi 0, %s163
      %s167 = sphi 0, %s166
      %s183 = sphi 0, %s167
      %s189 = sphi 0, %s191
      %s192 = sphi 0, %s189
      %s193 = sphi 0, %s192
      %s209 = sphi 0, %s193
    $region4: #{tpu_custom_call.1} parent=1 // loop_header_branch
      %25 = sbr.rel (%p23) target = $region8
    $region5: #{tpu_custom_call.1} parent=1 // loop_body
      %s27 = ssub.s32 %s22, 1
      %s28 = ssub.s32 %s22, 2
      %s29 = sadd.s32 %s22, 1
      %s30 = ssub.s32 %s22, %s29
      %p31 = scmp.eq.s32.totalorder %s30, 0
      %s33 = sadd.s32 %s32, 1
      %s34 = scalar_select %p31, %s32, %s33
      %p37 = pneg %p31
      %p38 = scmp.eq.s32.totalorder %s22, 1
      %p39 = por %p37, %p38
      %p40 = scmp.ne.s32.totalorder %s32, %s35
      %p41 = scmp.eq.s32.totalorder %s22, 0
      %p42 = por %p40, %p41
      %p43 = scmp.ne.s32.totalorder %s32, %s35
      %p44 = scmp.eq.s32.totalorder %s27, 1
      %p45 = por %p43, %p44
      %p46 = scmp.ne.s32.totalorder %s35, %s36
      %p47 = scmp.eq.s32.totalorder %s27, 0
      %p48 = por %p46, %p47
      %p49 = scmp.ne.s32.totalorder %s35, %s36
      %p50 = scmp.eq.s32.totalorder %s28, 1
      %p51 = por %p49, %p50
      %p53 = scmp.ne.s32.totalorder %s36, %s52
      %p54 = scmp.eq.s32.totalorder %s28, 0
      %p55 = por %p53, %p54
      %s57 = sadd.s32 %s56, 1
      %p60 = scmp.eq.s32.totalorder %s22, 1
      %p61 = scmp.ne.s32.totalorder %s56, %s58
      %p62 = scmp.eq.s32.totalorder %s22, 0
      %p63 = por %p61, %p62
      %p64 = scmp.ne.s32.totalorder %s56, %s58
      %p65 = scmp.eq.s32.totalorder %s27, 1
      %p66 = por %p64, %p65
      %p67 = scmp.ne.s32.totalorder %s58, %s59
      %p68 = scmp.eq.s32.totalorder %s27, 0
      %p69 = por %p67, %p68
      %p70 = scmp.ne.s32.totalorder %s58, %s59
      %p71 = scmp.eq.s32.totalorder %s28, 1
      %p72 = por %p70, %p71
      %p74 = scmp.ne.s32.totalorder %s59, %s73
      %p75 = scmp.eq.s32.totalorder %s28, 0
      %p76 = por %p74, %p75
      %s78 = sadd.s32 %s77, 1
      %p81 = scmp.eq.s32.totalorder %s22, 1
      %p82 = scmp.ne.s32.totalorder %s77, %s79
      %p83 = scmp.eq.s32.totalorder %s22, 0
      %p84 = por %p82, %p83
      %p85 = scmp.ne.s32.totalorder %s77, %s79
      %p86 = scmp.eq.s32.totalorder %s27, 1
      %p87 = por %p85, %p86
      %p88 = scmp.ne.s32.totalorder %s79, %s80
      %p89 = scmp.eq.s32.totalorder %s27, 0
      %p90 = por %p88, %p89
      %p91 = scmp.ne.s32.totalorder %s79, %s80
      %p92 = scmp.eq.s32.totalorder %s28, 1
      %p93 = por %p91, %p92
      %p95 = scmp.ne.s32.totalorder %s80, %s94
      %p96 = scmp.eq.s32.totalorder %s28, 0
      %p97 = por %p95, %p96
      %s99 = sadd.s32 %s98, 1
      %p102 = scmp.eq.s32.totalorder %s22, 1
      %p103 = scmp.ne.s32.totalorder %s98, %s100
      %p104 = scmp.eq.s32.totalorder %s22, 0
      %p105 = por %p103, %p104
      %p106 = scmp.ne.s32.totalorder %s98, %s100
      %p107 = scmp.eq.s32.totalorder %s27, 1
      %p108 = por %p106, %p107
      %p109 = scmp.ne.s32.totalorder %s100, %s101
      %p110 = scmp.eq.s32.totalorder %s27, 0
      %p111 = por %p109, %p110
      %p112 = scmp.ne.s32.totalorder %s100, %s101
      %p113 = scmp.eq.s32.totalorder %s28, 1
      %p114 = por %p112, %p113
      %p116 = scmp.ne.s32.totalorder %s101, %s115
      %p117 = scmp.eq.s32.totalorder %s28, 0
      %p118 = por %p116, %p117
      %s120 = sadd.s32 %s119, 1
      %p123 = scmp.eq.s32.totalorder %s22, 1
      %p124 = scmp.ne.s32.totalorder %s119, %s121
      %p125 = scmp.eq.s32.totalorder %s22, 0
      %p126 = por %p124, %p125
      %p127 = scmp.ne.s32.totalorder %s119, %s121
      %p128 = scmp.eq.s32.totalorder %s27, 1
      %p129 = por %p127, %p128
      %p130 = scmp.ne.s32.totalorder %s121, %s122
      %p131 = scmp.eq.s32.totalorder %s27, 0
      %p132 = por %p130, %p131
      %p133 = scmp.ne.s32.totalorder %s121, %s122
      %p134 = scmp.eq.s32.totalorder %s28, 1
      %p135 = por %p133, %p134
      %p137 = scmp.ne.s32.totalorder %s122, %s136
      %p138 = scmp.eq.s32.totalorder %s28, 0
      %p139 = por %p137, %p138
      %s141 = sadd.s32 %s140, 1
      %p144 = scmp.eq.s32.totalorder %s22, 1
      %p145 = scmp.ne.s32.totalorder %s140, %s142
      %p146 = scmp.eq.s32.totalorder %s22, 0
      %p147 = por %p145, %p146
      %p148 = scmp.ne.s32.totalorder %s140, %s142
      %p149 = scmp.eq.s32.totalorder %s27, 1
      %p150 = por %p148, %p149
      %p151 = scmp.ne.s32.totalorder %s142, %s143
      %p152 = scmp.eq.s32.totalorder %s27, 0
      %p153 = por %p151, %p152
      %p154 = scmp.ne.s32.totalorder %s142, %s143
      %p155 = scmp.eq.s32.totalorder %s28, 1
      %p156 = por %p154, %p155
      %p158 = scmp.ne.s32.totalorder %s143, %s157
      %p159 = scmp.eq.s32.totalorder %s28, 0
      %p160 = por %p158, %p159
      %s161 = ssub.s32 %s22, %s29
      %p162 = scmp.eq.s32.totalorder %s161, 0
      %s164 = sadd.s32 %s163, 1
      %s165 = scalar_select %p162, %s163, %s164
      %p168 = pneg %p162
      %p169 = scmp.eq.s32.totalorder %s22, 1
      %p170 = por %p168, %p169
      %p171 = scmp.ne.s32.totalorder %s163, %s166
      %p172 = scmp.eq.s32.totalorder %s22, 0
      %p173 = por %p171, %p172
      %p174 = scmp.ne.s32.totalorder %s163, %s166
      %p175 = scmp.eq.s32.totalorder %s27, 1
      %p176 = por %p174, %p175
      %p177 = scmp.ne.s32.totalorder %s166, %s167
      %p178 = scmp.eq.s32.totalorder %s27, 0
      %p179 = por %p177, %p178
      %p180 = scmp.ne.s32.totalorder %s166, %s167
      %p181 = scmp.eq.s32.totalorder %s28, 1
      %p182 = por %p180, %p181
      %p184 = scmp.ne.s32.totalorder %s167, %s183
      %p185 = scmp.eq.s32.totalorder %s28, 0
      %p186 = por %p184, %p185
      %s187 = ssub.s32 %s22, %s29
      %p188 = scmp.eq.s32.totalorder %s187, 0
      %s190 = sadd.s32 %s189, 1
      %s191 = scalar_select %p188, %s189, %s190
      %p194 = pneg %p188
      %p195 = scmp.eq.s32.totalorder %s22, 1
      %p196 = por %p194, %p195
      %p197 = scmp.ne.s32.totalorder %s189, %s192
      %p198 = scmp.eq.s32.totalorder %s22, 0
      %p199 = por %p197, %p198
      %p200 = scmp.ne.s32.totalorder %s189, %s192
      %p201 = scmp.eq.s32.totalorder %s27, 1
      %p202 = por %p200, %p201
      %p203 = scmp.ne.s32.totalorder %s192, %s193
      %p204 = scmp.eq.s32.totalorder %s27, 0
      %p205 = por %p203, %p204
      %p206 = scmp.ne.s32.totalorder %s192, %s193
      %p207 = scmp.eq.s32.totalorder %s28, 1
      %p208 = por %p206, %p207
      %p210 = scmp.ne.s32.totalorder %s193, %s209
      %p211 = scmp.eq.s32.totalorder %s28, 0
      %p212 = por %p210, %p211
      %p213 = scmp.le.s32.totalorder 1, %s22
      %p214 = scmp.lt.s32.totalorder %s22, 3
      %p215 = pnand %p213, %p214
      %p216 = pneg %p215
      // Predicated region
      $region9: #{tpu_custom_call.1} parent=5 // pred_check
        _
      $region10: #{tpu_custom_call.1} parent=5 // pred_check_branch
        %218 = sbr.rel (%p215) target = $region12
      $region11: #{tpu_custom_call.1} parent=5 // pred_region
        %s219 = ssub.s32 %s22, 1
        // Predicated region
        $region13: #{tpu_custom_call.1} parent=11 // pred_check
          %p220 = pneg %p69
        $region14: #{tpu_custom_call.1} parent=11 // pred_check_branch
          %222 = sbr.rel (%p220) target = $region16
        $region15: #{tpu_custom_call.1} parent=11 // pred_region
          _
        $region16: #{tpu_custom_call.1} parent=11 // pred_fallthru
          _
        // Predicated region
        $region17: #{tpu_custom_call.1} parent=11 // pred_check
          %p223 = pneg %p90
        $region18: #{tpu_custom_call.1} parent=11 // pred_check_branch
          %225 = sbr.rel (%p223) target = $region20
        $region19: #{tpu_custom_call.1} parent=11 // pred_region
          _
        $region20: #{tpu_custom_call.1} parent=11 // pred_fallthru
          _
        // Predicated region
        $region21: #{tpu_custom_call.1} parent=11 // pred_check
          %p226 = pneg %p111
        $region22: #{tpu_custom_call.1} parent=11 // pred_check_branch
          %228 = sbr.rel (%p226) target = $region24
        $region23: #{tpu_custom_call.1} parent=11 // pred_region
          %230 = vsyncadd [#allocation3], 0
          %s231 = sshll.u32 %s3, 4
          %s232 = int_to_ptr.hbm [resolvable:$true] %s231
          %s233 = sshll.u32 [#allocation2], 4
          %s234 = int_to_ptr.vmem [resolvable:$true] %s233
          %239 = dma.hbm_to_vmem [thread:$0]  %s232, 1024, %s234, [#allocation3], 64, 64, 4
        $region24: #{tpu_custom_call.1} parent=11 // pred_fallthru
          _
        // Predicated region
        $region25: #{tpu_custom_call.1} parent=11 // pred_check
          %p240 = pneg %p132
        $region26: #{tpu_custom_call.1} parent=11 // pred_check_branch
          %242 = sbr.rel (%p240) target = $region28
        $region27: #{tpu_custom_call.1} parent=11 // pred_region
          %244 = vsyncadd [#allocation6], 0
          %s245 = sshll.u32 %s4, 4
          %s246 = int_to_ptr.hbm [resolvable:$true] %s245
          %s247 = sshll.u32 [#allocation5], 4
          %s248 = int_to_ptr.vmem [resolvable:$true] %s247
          %253 = dma.hbm_to_vmem [thread:$0]  %s246, 1024, %s248, [#allocation6], 64, 64, 4
        $region28: #{tpu_custom_call.1} parent=11 // pred_fallthru
          _
        // Predicated region
        $region29: #{tpu_custom_call.1} parent=11 // pred_check
          %p254 = pneg %p153
        $region30: #{tpu_custom_call.1} parent=11 // pred_check_branch
          %256 = sbr.rel (%p254) target = $region32
        $region31: #{tpu_custom_call.1} parent=11 // pred_region
          _
        $region32: #{tpu_custom_call.1} parent=11 // pred_fallthru
          _
      $region12: #{tpu_custom_call.1} parent=5 // pred_fallthru
        _
      %p257 = scmp.lt.s32.totalorder %s22, 2
      // Predicated region
      $region33: #{tpu_custom_call.1} parent=5 // pred_check
        %p258 = pneg %p257
      $region34: #{tpu_custom_call.1} parent=5 // pred_check_branch
        %260 = sbr.rel (%p258) target = $region36
      $region35: #{tpu_custom_call.1} parent=5 // pred_region
        // Predicated region
        $region37: #{tpu_custom_call.1} parent=35 // pred_check
          %p261 = pneg %p42
        $region38: #{tpu_custom_call.1} parent=35 // pred_check_branch
          %263 = sbr.rel (%p261) target = $region40
        $region39: #{tpu_custom_call.1} parent=35 // pred_region
          %p264 = scmp.lt.s32.totalorder %s22, 1
          %s265 = scalar_select %p264, %s22, 1
          %s266 = smul.addr %s265, 4
          %s267 = smul.addr %s266, 4
          %s268 = scalar_lea.vmem %s0, %s267
        $region40: #{tpu_custom_call.1} parent=35 // pred_fallthru
          _
      $region36: #{tpu_custom_call.1} parent=5 // pred_fallthru
        _
      %p269 = scmp.le.s32.totalorder 1, %s22
      %p270 = scmp.lt.s32.totalorder %s22, 3
      %p271 = pnand %p269, %p270
      %p272 = pneg %p271
      // Predicated region
      $region41: #{tpu_custom_call.1} parent=5 // pred_check
        _
      $region42: #{tpu_custom_call.1} parent=5 // pred_check_branch
        %274 = sbr.rel (%p271) target = $region44
      $region43: #{tpu_custom_call.1} parent=5 // pred_region
        %s275 = ssub.s32 %s22, 1
        // Predicated region
        $region45: #{tpu_custom_call.1} parent=43 // pred_check
          %p276 = pneg %p111
        $region46: #{tpu_custom_call.1} parent=43 // pred_check_branch
          %278 = sbr.rel (%p276) target = $region48
        $region47: #{tpu_custom_call.1} parent=43 // pred_region
          %280 = dma.done [#allocation3], 1024
        $region48: #{tpu_custom_call.1} parent=43 // pred_fallthru
          _
        // Predicated region
        $region49: #{tpu_custom_call.1} parent=43 // pred_check
          %p281 = pneg %p132
        $region50: #{tpu_custom_call.1} parent=43 // pred_check_branch
          %283 = sbr.rel (%p281) target = $region52
        $region51: #{tpu_custom_call.1} parent=43 // pred_region
          %285 = dma.done [#allocation6], 1024
        $region52: #{tpu_custom_call.1} parent=43 // pred_fallthru
          _
        %p286 = scmp.lt.s32.totalorder %s27, 1
        %s287 = scalar_select %p286, %s27, 1
        %s288 = smul.addr %s287, 4
        %s289 = smul.addr %s288, 4
        %s290 = scalar_lea.vmem %s0, %s289
        %p291 = pneg %p48
        %p292 = pneg %p45
        %p293 = pneg %p69
        %p294 = pneg %p66
        %p295 = pneg %p90
        %p296 = pneg %p87
        %p297 = pneg %p111
        %p298 = pneg %p108
        %p299 = pneg %p132
        %p300 = pneg %p129
        %p301 = pneg %p153
        %p302 = pneg %p150
        %p303 = pneg %p179
        %p304 = pneg %p176
        %s305 = sand.u32 %s166, 1
        %s306 = scalar_lea.sflag [#allocation4], %s305
        %s307 = sand.u32 %s166, 1
        %s308 = smul.addr %s307, 16
        %s309 = scalar_lea.vmem [#allocation7], %s308
        %p310 = pneg %p205
        %p311 = pneg %p202
        %s312 = sand.u32 %s192, 1
        %s313 = scalar_lea.sflag [#allocation9], %s312
        %s314 = sand.u32 %s192, 1
        %s315 = smul.addr %s314, 16
        %s316 = scalar_lea.vmem [#allocation8], %s315
        %p317 = scmp.lt.s32.totalorder %s27, 1
        %s318 = scalar_select %p317, %s27, 1
        %s319 = smul.addr %s318, 4
        %s320 = smul.addr %s319, 4
        %s321 = scalar_lea.vmem %s0, %s320
        %v323 = vld [vmem:[%s321] sm:$0xf]
        %v324 = vld [vmem:[%s321 + $0x4] sm:$0xf]
        %v325 = vld [vmem:[%s321 + $0x8] sm:$0xf]
        %v326 = vld [vmem:[%s321 + $0xc] sm:$0xf]
        %v327 = vld [vmem:[%s1] sm:$0x3]
        %v332 = vunpack.c.l.b16 %v323
        %v333 = vunpack.c.l.b16 %v324
        %v334 = vunpack.c.l.b16 %v325
        %v335 = vunpack.c.l.b16 %v326
        %v336 = vpack.c.b16 %v333, %v332
        %v337 = vpack.c.b16 %v335, %v334
        %vm338 = vcmask 31744
        %v340 = vsel %vm338, %v336, 0
        %v343 = vsel %vm338, %v337, 0
        %vm345 = vcmask 1041408
        %v347 = vsel %vm345, %v327, 0
        %349 = vmatpush.bf16.msra.mxu0 0
        %350 = vmatpush.bf16.msra.mxu0 0
        %351 = vmatpush.bf16.msra.mxu0 0
        %352 = vmatpush.bf16.msra.mxu0 0
        %353 = vmatpush.bf16.msra.mxu0 0
        %354 = vmatpush.bf16.msra.mxu0 0
        %355 = vmatpush.bf16.msra.mxu0 0
        %356 = vmatpush.bf16.msra.mxu0 %v347
        %357 = vmatmul.bf16.gmra.mxu0 %v340
        %v358 = vpop.f32.mrf.mxu0
        %v359 = vadd.f32 0.0, %v358
        %v360 = vpop.f32.mrf.mxu0
        %v361 = vadd.f32 0.0, %v360
        %362 = vmatmul.bf16.gmra.mxu0 %v343
        %v363 = vpop.f32.mrf.mxu0
        %v364 = vadd.f32 0.0, %v363
        %v365 = vpop.f32.mrf.mxu0
        %v366 = vadd.f32 0.0, %v365
        %367 = vdwg.mxu0
        %v368 = vmul.f32 %v359, %v359
        %v369 = vmul.f32 %v361, %v361
        %v370 = vmul.f32 %v364, %v364
        %v371 = vmul.f32 %v366, %v366
        %v372 = vmul.f32 %v359, %v368
        %v373 = vmul.f32 %v361, %v369
        %v374 = vmul.f32 %v364, %v370
        %v375 = vmul.f32 %v366, %v371
        %v376 = vmul.f32 %v372, 0.044715
        %v377 = vmul.f32 %v373, 0.044715
        %v378 = vmul.f32 %v374, 0.044715
        %v379 = vmul.f32 %v375, 0.044715
        %v380 = vadd.f32 %v359, %v376
        %v381 = vadd.f32 %v361, %v377
        %v382 = vadd.f32 %v364, %v378
        %v383 = vadd.f32 %v366, %v379
        %v384 = vmul.f32 %v380, 0.7978846
        %v385 = vmul.f32 %v381, 0.7978846
        %v386 = vmul.f32 %v382, 0.7978846
        %v387 = vmul.f32 %v383, 0.7978846
        %v388 = vtanh.pop %v384
        %v389 = vtanh.pop %v385
        %v390 = vtanh.pop %v386
        %v391 = vtanh.pop %v387
        %v392 = vadd.f32 %v388, 1.0
        %v393 = vadd.f32 %v389, 1.0
        %v394 = vadd.f32 %v390, 1.0
        %v395 = vadd.f32 %v391, 1.0
        %v396 = vmul.f32 %v392, 0.5
        %v397 = vmul.f32 %v393, 0.5
        %v398 = vmul.f32 %v394, 0.5
        %v399 = vmul.f32 %v395, 0.5
        %v400 = vmul.f32 %v359, %v396
        %v401 = vmul.f32 %v361, %v397
        %v402 = vmul.f32 %v364, %v398
        %v403 = vmul.f32 %v366, %v399
        %v404 = vpack.c.bf16 %v400, %v400
        %v405 = vpack.c.bf16 %v401, %v401
        %v406 = vpack.c.bf16 %v402, %v402
        %v407 = vpack.c.bf16 %v403, %v403
        %408 = vst [vmem:[%s309] sm:$0xf] %v404
        %409 = vst [vmem:[%s309 + $0x4] sm:$0xf] %v405
        %410 = vst [vmem:[%s309 + $0x8] sm:$0xf] %v406
        %411 = vst [vmem:[%s309 + $0xc] sm:$0xf] %v407
        %v412 = vld [vmem:[%s309] sm:$0xf]
        %v413 = vld [vmem:[%s309 + $0x4] sm:$0xf]
        %v414 = vld [vmem:[%s309 + $0x8] sm:$0xf]
        %v415 = vld [vmem:[%s309 + $0xc] sm:$0xf]
        %v416 = vld [vmem:[%s321] sm:$0xf]
        %v417 = vld [vmem:[%s321 + $0x4] sm:$0xf]
        %v418 = vld [vmem:[%s321 + $0x8] sm:$0xf]
        %v419 = vld [vmem:[%s321 + $0xc] sm:$0xf]
        %v420 = vld [vmem:[%s2] sm:$0x3]
        %v425 = vunpack.c.l.b16 %v416
        %v426 = vunpack.c.l.b16 %v417
        %v427 = vunpack.c.l.b16 %v418
        %v428 = vunpack.c.l.b16 %v419
        %v429 = vpack.c.b16 %v426, %v425
        %v430 = vpack.c.b16 %v428, %v427
        %v432 = vsel %vm338, %v429, 0
        %v435 = vsel %vm338, %v430, 0
        %v438 = vsel %vm345, %v420, 0
        %440 = vmatpush.bf16.msra.mxu0 0
        %441 = vmatpush.bf16.msra.mxu0 0
        %442 = vmatpush.bf16.msra.mxu0 0
        %443 = vmatpush.bf16.msra.mxu0 0
        %444 = vmatpush.bf16.msra.mxu0 0
        %445 = vmatpush.bf16.msra.mxu0 0
        %446 = vmatpush.bf16.msra.mxu0 0
        %447 = vmatpush.bf16.msra.mxu0 %v438
        %448 = vmatmul.bf16.gmra.mxu0 %v432
        %v449 = vpop.f32.mrf.mxu0
        %v450 = vadd.f32 0.0, %v449
        %v451 = vpop.f32.mrf.mxu0
        %v452 = vadd.f32 0.0, %v451
        %453 = vmatmul.bf16.gmra.mxu0 %v435
        %v454 = vpop.f32.mrf.mxu0
        %v455 = vadd.f32 0.0, %v454
        %v456 = vpop.f32.mrf.mxu0
        %v457 = vadd.f32 0.0, %v456
        %458 = vdwg.mxu0
        %v459 = vmul.f32 %v450, %v450
        %v460 = vmul.f32 %v452, %v452
        %v461 = vmul.f32 %v455, %v455
        %v462 = vmul.f32 %v457, %v457
        %v463 = vmul.f32 %v450, %v459
        %v464 = vmul.f32 %v452, %v460
        %v465 = vmul.f32 %v455, %v461
        %v466 = vmul.f32 %v457, %v462
        %v467 = vmul.f32 %v463, 0.044715
        %v468 = vmul.f32 %v464, 0.044715
        %v469 = vmul.f32 %v465, 0.044715
        %v470 = vmul.f32 %v466, 0.044715
        %v471 = vadd.f32 %v450, %v467
        %v472 = vadd.f32 %v452, %v468
        %v473 = vadd.f32 %v455, %v469
        %v474 = vadd.f32 %v457, %v470
        %v475 = vmul.f32 %v471, 0.7978846
        %v476 = vmul.f32 %v472, 0.7978846
        %v477 = vmul.f32 %v473, 0.7978846
        %v478 = vmul.f32 %v474, 0.7978846
        %v479 = vtanh.pop %v475
        %v480 = vtanh.pop %v476
        %v481 = vtanh.pop %v477
        %v482 = vtanh.pop %v478
        %v483 = vadd.f32 %v479, 1.0
        %v484 = vadd.f32 %v480, 1.0
        %v485 = vadd.f32 %v481, 1.0
        %v486 = vadd.f32 %v482, 1.0
        %v487 = vmul.f32 %v483, 0.5
        %v488 = vmul.f32 %v484, 0.5
        %v489 = vmul.f32 %v485, 0.5
        %v490 = vmul.f32 %v486, 0.5
        %v491 = vmul.f32 %v450, %v487
        %v492 = vmul.f32 %v452, %v488
        %v493 = vmul.f32 %v455, %v489
        %v494 = vmul.f32 %v457, %v490
        %v495 = vld [vmem:[#allocation2] sm:$0xf]
        %v496 = vld [vmem:[#allocation2 + $0x4] sm:$0xf]
        %v497 = vld [vmem:[#allocation2 + $0x8] sm:$0xf]
        %v498 = vld [vmem:[#allocation2 + $0xc] sm:$0xf]
        %v499 = vld [vmem:[#allocation2 + $0x10] sm:$0xf]
        %v500 = vld [vmem:[#allocation2 + $0x14] sm:$0xf]
        %v501 = vld [vmem:[#allocation2 + $0x18] sm:$0xf]
        %v502 = vld [vmem:[#allocation2 + $0x1c] sm:$0xf]
        %v503 = vld [vmem:[#allocation2 + $0x20] sm:$0xf]
        %v504 = vld [vmem:[#allocation2 + $0x24] sm:$0xf]
        %v505 = vld [vmem:[#allocation2 + $0x28] sm:$0xf]
        %v506 = vld [vmem:[#allocation2 + $0x2c] sm:$0xf]
        %v507 = vld [vmem:[#allocation2 + $0x30] sm:$0xf]
        %v508 = vld [vmem:[#allocation2 + $0x34] sm:$0xf]
        %v509 = vld [vmem:[#allocation2 + $0x38] sm:$0xf]
        %v510 = vld [vmem:[#allocation2 + $0x3c] sm:$0xf]
        %v511 = vpack.c.bf16 %v492, %v491
        %v512 = vpack.c.bf16 %v494, %v493
        %v513 = vld [vmem:[#allocation5] sm:$0xf]
        %v514 = vld [vmem:[#allocation5 + $0x4] sm:$0xf]
        %v515 = vld [vmem:[#allocation5 + $0x8] sm:$0xf]
        %v516 = vld [vmem:[#allocation5 + $0xc] sm:$0xf]
        %v517 = vld [vmem:[#allocation5 + $0x10] sm:$0xf]
        %v518 = vld [vmem:[#allocation5 + $0x14] sm:$0xf]
        %v519 = vld [vmem:[#allocation5 + $0x18] sm:$0xf]
        %v520 = vld [vmem:[#allocation5 + $0x1c] sm:$0xf]
        %v521 = vld [vmem:[#allocation5 + $0x20] sm:$0xf]
        %v522 = vld [vmem:[#allocation5 + $0x24] sm:$0xf]
        %v523 = vld [vmem:[#allocation5 + $0x28] sm:$0xf]
        %v524 = vld [vmem:[#allocation5 + $0x2c] sm:$0xf]
        %v525 = vld [vmem:[#allocation5 + $0x30] sm:$0xf]
        %v526 = vld [vmem:[#allocation5 + $0x34] sm:$0xf]
        %v527 = vld [vmem:[#allocation5 + $0x38] sm:$0xf]
        %v528 = vld [vmem:[#allocation5 + $0x3c] sm:$0xf]
        %v545 = vunpack.c.l.b16 %v513
        %v546 = vunpack.c.l.b16 %v514
        %v547 = vunpack.c.l.b16 %v515
        %v548 = vunpack.c.l.b16 %v516
        %v549 = vunpack.c.l.b16 %v517
        %v550 = vunpack.c.l.b16 %v518
        %v551 = vunpack.c.l.b16 %v519
        %v552 = vunpack.c.l.b16 %v520
        %v553 = vunpack.c.l.b16 %v521
        %v554 = vunpack.c.l.b16 %v522
        %v555 = vunpack.c.l.b16 %v523
        %v556 = vunpack.c.l.b16 %v524
        %v557 = vunpack.c.l.b16 %v525
        %v558 = vunpack.c.l.b16 %v526
        %v559 = vunpack.c.l.b16 %v527
        %v560 = vunpack.c.l.b16 %v528
        %v561 = vpack.c.b16 %v546, %v545
        %v562 = vpack.c.b16 %v548, %v547
        %v563 = vpack.c.b16 %v550, %v549
        %v564 = vpack.c.b16 %v552, %v551
        %v565 = vpack.c.b16 %v554, %v553
        %v566 = vpack.c.b16 %v556, %v555
        %v567 = vpack.c.b16 %v558, %v557
        %v568 = vpack.c.b16 %v560, %v559
        %577 = vmatpush.bf16.msra.mxu0 %v568
        %578 = vmatpush.bf16.msra.mxu0 %v567
        %579 = vmatpush.bf16.msra.mxu0 %v566
        %580 = vmatpush.bf16.msra.mxu0 %v565
        %581 = vmatpush.bf16.msra.mxu0 %v564
        %582 = vmatpush.bf16.msra.mxu0 %v563
        %583 = vmatpush.bf16.msra.mxu0 %v562
        %584 = vmatpush.bf16.msra.mxu0 %v561
        %585 = vmatmul.bf16.gmra.mxu0 %v511
        %v586 = vpop.f32.mrf.mxu0
        %v587 = vadd.f32 0.0, %v586
        %v588 = vpop.f32.mrf.mxu0
        %v589 = vadd.f32 0.0, %v588
        %590 = vmatmul.bf16.gmra.mxu0 %v512
        %v591 = vpop.f32.mrf.mxu0
        %v592 = vadd.f32 0.0, %v591
        %v593 = vpop.f32.mrf.mxu0
        %v594 = vadd.f32 0.0, %v593
        %595 = vdwg.mxu0
        %v600 = vunpack.c.l.b16 %v412
        %v601 = vunpack.c.l.b16 %v413
        %v602 = vunpack.c.l.b16 %v414
        %v603 = vunpack.c.l.b16 %v415
        %v604 = vpack.c.b16 %v601, %v600
        %v605 = vpack.c.b16 %v603, %v602
        %v624 = vunpack.c.l.b16 %v495
        %v625 = vunpack.c.l.b16 %v496
        %v626 = vunpack.c.l.b16 %v497
        %v627 = vunpack.c.l.b16 %v498
        %v628 = vunpack.c.l.b16 %v499
        %v629 = vunpack.c.l.b16 %v500
        %v630 = vunpack.c.l.b16 %v501
        %v631 = vunpack.c.l.b16 %v502
        %v632 = vunpack.c.l.b16 %v503
        %v633 = vunpack.c.l.b16 %v504
        %v634 = vunpack.c.l.b16 %v505
        %v635 = vunpack.c.l.b16 %v506
        %v636 = vunpack.c.l.b16 %v507
        %v637 = vunpack.c.l.b16 %v508
        %v638 = vunpack.c.l.b16 %v509
        %v639 = vunpack.c.l.b16 %v510
        %v640 = vpack.c.b16 %v625, %v624
        %v641 = vpack.c.b16 %v627, %v626
        %v642 = vpack.c.b16 %v629, %v628
        %v643 = vpack.c.b16 %v631, %v630
        %v644 = vpack.c.b16 %v633, %v632
        %v645 = vpack.c.b16 %v635, %v634
        %v646 = vpack.c.b16 %v637, %v636
        %v647 = vpack.c.b16 %v639, %v638
        %656 = vmatpush.bf16.msra.mxu0 %v647
        %657 = vmatpush.bf16.msra.mxu0 %v646
        %658 = vmatpush.bf16.msra.mxu0 %v645
        %659 = vmatpush.bf16.msra.mxu0 %v644
        %660 = vmatpush.bf16.msra.mxu0 %v643
        %661 = vmatpush.bf16.msra.mxu0 %v642
        %662 = vmatpush.bf16.msra.mxu0 %v641
        %663 = vmatpush.bf16.msra.mxu0 %v640
        %664 = vmatmul.bf16.gmra.mxu0 %v604
        %v665 = vpop.f32.mrf.mxu0
        %v666 = vadd.f32 %v587, %v665
        %v667 = vpop.f32.mrf.mxu0
        %v668 = vadd.f32 %v589, %v667
        %669 = vmatmul.bf16.gmra.mxu0 %v605
        %v670 = vpop.f32.mrf.mxu0
        %v671 = vadd.f32 %v592, %v670
        %v672 = vpop.f32.mrf.mxu0
        %v673 = vadd.f32 %v594, %v672
        %674 = vdwg.mxu0
        %v675 = vld [vmem:[%s5] sm:$0x1]
        %v677 = vperm.slane %v675, 0
        %v679 = vadd.f32 %v666, %v677
        %v680 = vadd.f32 %v668, %v677
        %v681 = vadd.f32 %v671, %v677
        %v682 = vadd.f32 %v673, %v677
        %v683 = vadd.f32 %v491, %v679
        %v684 = vadd.f32 %v492, %v680
        %v685 = vadd.f32 %v493, %v681
        %v686 = vadd.f32 %v494, %v682
        %v687 = vpack.c.bf16 %v683, %v683
        %v688 = vpack.c.bf16 %v684, %v684
        %v689 = vpack.c.bf16 %v685, %v685
        %v690 = vpack.c.bf16 %v686, %v686
        %691 = vst [vmem:[%s316] sm:$0xf] %v687
        %692 = vst [vmem:[%s316 + $0x4] sm:$0xf] %v688
        %693 = vst [vmem:[%s316 + $0x8] sm:$0xf] %v689
        %694 = vst [vmem:[%s316 + $0xc] sm:$0xf] %v690
        %s695 = sand.u32 %s166, 1
        %s696 = scalar_lea.sflag [#allocation4], %s695
        %s697 = sand.u32 %s166, 1
        %s698 = smul.addr %s697, 16
        %s699 = scalar_lea.vmem [#allocation7], %s698
        %s700 = sand.u32 %s192, 1
        %s701 = scalar_lea.sflag [#allocation9], %s700
        %s702 = sand.u32 %s192, 1
        %s703 = smul.addr %s702, 16
        %s704 = scalar_lea.vmem [#allocation8], %s703
        // Predicated region
        $region53: #{tpu_custom_call.1} parent=43 // pred_check
          %p705 = pneg %p176
        $region54: #{tpu_custom_call.1} parent=43 // pred_check_branch
          %707 = sbr.rel (%p705) target = $region56
        $region55: #{tpu_custom_call.1} parent=43 // pred_region
          %709 = vsyncadd %s696, 0
          %s710 = smul.addr %s27, 4
          %s711 = smul.addr %s710, 4
          %s712 = scalar_lea.hbm %s6, %s711
          %s713 = sshll.u32 %s699, 4
          %s714 = int_to_ptr.vmem [resolvable:$true] %s713
          %s715 = sshll.u32 %s712, 4
          %s716 = int_to_ptr.hbm [resolvable:$true] %s715
          %721 = dma.vmem_to_hbm [thread:$0]  %s714, 256, %s716, %s696, 64, 64, 4
        $region56: #{tpu_custom_call.1} parent=43 // pred_fallthru
          _
        // Predicated region
        $region57: #{tpu_custom_call.1} parent=43 // pred_check
          %p722 = pneg %p202
        $region58: #{tpu_custom_call.1} parent=43 // pred_check_branch
          %724 = sbr.rel (%p722) target = $region60
        $region59: #{tpu_custom_call.1} parent=43 // pred_region
          %726 = vsyncadd %s701, 0
          %s727 = smul.addr %s27, 4
          %s728 = smul.addr %s727, 4
          %s729 = scalar_lea.hbm %s7, %s728
          %s730 = sshll.u32 %s704, 4
          %s731 = int_to_ptr.vmem [resolvable:$true] %s730
          %s732 = sshll.u32 %s729, 4
          %s733 = int_to_ptr.hbm [resolvable:$true] %s732
          %738 = dma.vmem_to_hbm [thread:$0]  %s731, 256, %s733, %s701, 64, 64, 4
        $region60: #{tpu_custom_call.1} parent=43 // pred_fallthru
          _
      $region44: #{tpu_custom_call.1} parent=5 // pred_fallthru
        _
      %p739 = scmp.le.s32.totalorder 2, %s22
      // Predicated region
      $region61: #{tpu_custom_call.1} parent=5 // pred_check
        %p740 = pneg %p739
      $region62: #{tpu_custom_call.1} parent=5 // pred_check_branch
        %742 = sbr.rel (%p740) target = $region64
      $region63: #{tpu_custom_call.1} parent=5 // pred_region
        %s743 = ssub.s32 %s22, 2
        // Predicated region
        $region65: #{tpu_custom_call.1} parent=63 // pred_check
          %p744 = pneg %p182
        $region66: #{tpu_custom_call.1} parent=63 // pred_check_branch
          %746 = sbr.rel (%p744) target = $region68
        $region67: #{tpu_custom_call.1} parent=63 // pred_region
          %s747 = sand.u32 %s167, 1
          %s748 = scalar_lea.sflag [#allocation4], %s747
          %s749 = sand.u32 %s167, 1
          %s750 = smul.addr %s749, 16
          %s751 = scalar_lea.vmem [#allocation7], %s750
          %753 = dma.done %s748, 256
        $region68: #{tpu_custom_call.1} parent=63 // pred_fallthru
          _
        // Predicated region
        $region69: #{tpu_custom_call.1} parent=63 // pred_check
          %p754 = pneg %p208
        $region70: #{tpu_custom_call.1} parent=63 // pred_check_branch
          %756 = sbr.rel (%p754) target = $region72
        $region71: #{tpu_custom_call.1} parent=63 // pred_region
          %s757 = sand.u32 %s193, 1
          %s758 = scalar_lea.sflag [#allocation9], %s757
          %s759 = sand.u32 %s193, 1
          %s760 = smul.addr %s759, 16
          %s761 = scalar_lea.vmem [#allocation8], %s760
          %763 = dma.done %s758, 256
        $region72: #{tpu_custom_call.1} parent=63 // pred_fallthru
          _
      $region64: #{tpu_custom_call.1} parent=5 // pred_fallthru
        _
    $region6: #{tpu_custom_call.1} parent=1 // loop_footer
      %s26 = sadd.s32 1, %s22
    $region7: #{tpu_custom_call.1} parent=1 // loop_footer_branch
      %21 = sbr.rel target = $region3
    $region8: #{tpu_custom_call.1} parent=1 // loop_exit
      _
    %764 = vsyncpa [#allocation3], 1
    %s765 = scalar_lea.sflag [#allocation3], 1
    %766 = vsyncpa %s765, 1
    %767 = vsyncpa [#allocation6], 1
    %768 = vsyncpa [#allocation4], 1
    %s769 = scalar_lea.sflag [#allocation4], 1
    %770 = vsyncpa %s769, 1
    %771 = vsyncpa [#allocation9], 1
    %s772 = scalar_lea.sflag [#allocation9], 1
    %773 = vsyncpa %s772, 1

</llo_original>
